<compile_context>
chip_gen: v7x
topology: tpu7x:2x2x1
jax: 0.10.0
libtpu: 0.0.40
codegen_flags: <defaults>
</compile_context>

<pallas_src>
from functools import partial

import jax
import jax.numpy as jnp
from jax.experimental import pallas as pl
from jax.experimental.pallas import tpu as pltpu


def _round_up(x, m):
    return ((x + m - 1) // m) * m


def _sigmoid(x):
    # single EUP tanh per gate; avoids exp overflow for very negative inputs
    return 0.5 * jnp.tanh(0.5 * x) + 0.5


def decoder_attention_kernel(num_layers, hp, tn, num_tiles,
                             x_ref, h0_ref, c0_ref, enc_ref,
                             w_ref, b_ref, w12_ref, lin_w_ref, lin_b_ref,
                             probs_ref, hn_ref, cn_ref,
                             xh_s, attn_s, logit_s, m_s, l_s):
    bf16 = jnp.bfloat16
    j = pl.program_id(0)

    # ---------- tile 0: LSTM step + attention + tanh combine (cached in scratch) -----
    @pl.when(j == 0)
    def _():
        x = x_ref[...]                                    # (Bp, Hp) f32 embedded token
        for l in range(num_layers):                       # static Python loop (L small)
            h = h0_ref[l]                                 # (Bp, Hp)
            c = c0_ref[l]
            xh_s[:, :hp] = x
            xh_s[:, hp:] = h
            # fused gates: [x|h] @ [Wih^T ; Whh^T] + (b_ih + b_hh)  -> (Bp, 4*Hp)
            gates = jnp.dot(xh_s[...].astype(bf16), w_ref[l],
                            preferred_element_type=jnp.float32) + b_ref[l]
            i_g = _sigmoid(gates[:, 0 * hp:1 * hp])
            f_g = _sigmoid(gates[:, 1 * hp:2 * hp])
            g_g = jnp.tanh(gates[:, 2 * hp:3 * hp])
            o_g = _sigmoid(gates[:, 3 * hp:4 * hp])
            c_new = f_g * c + i_g * g_g
            h_new = o_g * jnp.tanh(c_new)
            hn_ref[l] = h_new
            cn_ref[l] = c_new
            x = h_new                                     # inter-layer dropout: identity

        out = x                                           # (Bp, Hp) LSTM output

        # raw dot-product attention (no softmax over scores — as in the reference)
        enc = enc_ref[...].astype(jnp.float32)            # (Bp, T, Hp)
        scores = jnp.sum(out[:, None, :] * enc, axis=-1, keepdims=True)   # (Bp, T, 1)
        ctx = jnp.sum(scores * enc, axis=1)                                # (Bp, Hp)
        # TODO(synk): for long encoder sequences express this as per-batch matmuls
        # (einsum 'bh,bth->bt' / 'bt,bth->bh') so no (Bp,T,Hp) temporary is formed.

        # fused tanh combine: tanh([out | ctx] @ [W1^T ; W2^T])
        xh_s[:, :hp] = out
        xh_s[:, hp:] = ctx
        attn_s[...] = jnp.tanh(jnp.dot(xh_s[...].astype(bf16), w12_ref[...],
                                       preferred_element_type=jnp.float32))
        # output dropout: identity (eval mode)

        m_s[...] = jnp.full_like(m_s, -jnp.inf)
        l_s[...] = jnp.zeros_like(l_s)

    # ---------- every tile: logits for this vocab slice + online max/sum -------------
    logits = jnp.dot(attn_s[...].astype(bf16), lin_w_ref[...],
                     preferred_element_type=jnp.float32) + lin_b_ref[...]   # (Bp, TN)
    logit_s[j] = logits                                   # stash raw logits (VMEM)
    m_new = jnp.maximum(m_s[...], jnp.max(logits, axis=1, keepdims=True))
    l_s[...] = (l_s[...] * jnp.exp(m_s[...] - m_new)
                + jnp.sum(jnp.exp(logits - m_new), axis=1, keepdims=True))
    m_s[...] = m_new

    # ---------- last tile: normalize the whole slab into the resident output ---------
    @pl.when(j == pl.num_programs(0) - 1)
    def _():
        denom = l_s[...]
        inv = pl.reciprocal(denom, approx=True)
        inv = inv * (2.0 - denom * inv)                   # one Newton step -> f32-exact
        m = m_s[...]
        for t in range(num_tiles):                        # static unroll; static slices
            probs_ref[:, t * tn:(t + 1) * tn] = jnp.exp(logit_s[t] - m) * inv


def init_params(key, v_size, hid_dim, num_layers):
    """Deterministic synthetic parameters (PyTorch-module-shaped)."""
    ks = jax.random.split(key, 9)
    s = 0.1
    f32 = jnp.float32
    return {
        # nn.Embedding(v_size, hid_dim)
        "embed": (jax.random.normal(ks[0], (v_size, hid_dim)) * s).astype(f32),
        # LSTM weights, gates stacked as (L, 4[i,f,g,o], H_out, H_in); emb_dim == hid_dim
        "wih": (jax.random.normal(ks[1], (num_layers, 4, hid_dim, hid_dim)) * s).astype(f32),
        "whh": (jax.random.normal(ks[2], (num_layers, 4, hid_dim, hid_dim)) * s).astype(f32),
        "bih": (jax.random.normal(ks[3], (num_layers, 4, 1, hid_dim)) * s).astype(f32),
        "bhh": (jax.random.normal(ks[4], (num_layers, 4, 1, hid_dim)) * s).astype(f32),
        # W1, W2: Linear(hid_dim, hid_dim, bias=False)
        "w1": (jax.random.normal(ks[5], (hid_dim, hid_dim)) * s).astype(f32),
        "w2": (jax.random.normal(ks[6], (hid_dim, hid_dim)) * s).astype(f32),
        # linear: Linear(hid_dim, v_size)
        "lin_w": (jax.random.normal(ks[7], (v_size, hid_dim)) * s).astype(f32),
        "lin_b": (jax.random.normal(ks[8], (1, v_size)) * s).astype(f32),
    }


def pack_params(params, num_layers, tn=128):
    """One-time host-side prep: fused / transposed / padded, bf16, lane-dense layout."""
    H = params["w1"].shape[0]
    V = params["lin_w"].shape[0]
    Hp = _round_up(H, 128)
    Vp = _round_up(V, tn)
    f32, bf16 = jnp.float32, jnp.bfloat16

    # Fused, pre-transposed LSTM weights: (L, 2*Hp, 4*Hp) = [Wih^T ; Whh^T], gates [i|f|g|o]
    wfused = jnp.zeros((num_layers, 2 * Hp, 4 * Hp), f32)
    b = jnp.zeros((num_layers, 1, 4 * Hp), f32)
    for l in range(num_layers):
        for g in range(4):
            wfused = wfused.at[l, :H, g * Hp:g * Hp + H].set(params["wih"][l, g].T)
            wfused = wfused.at[l, Hp:Hp + H, g * Hp:g * Hp + H].set(params["whh"][l, g].T)
            b = b.at[l, 0, g * Hp:g * Hp + H].set(
                params["bih"][l, g, 0] + params["bhh"][l, g, 0])

    # Fused attention combine: [W1^T ; W2^T] -> (2*Hp, Hp)
    w12 = jnp.zeros((2 * Hp, Hp), f32)
    w12 = w12.at[:H, :H].set(params["w1"].T)
    w12 = w12.at[Hp:Hp + H, :H].set(params["w2"].T)

    lin_wt = jnp.zeros((Hp, Vp), f32).at[:H, :V].set(params["lin_w"].T)
    # Padded vocab columns get a huge negative bias so their softmax mass is exactly 0.
    lin_b = jnp.full((1, Vp), -1e30, f32).at[0, :V].set(params["lin_b"][0])
    embed_p = jnp.zeros((V, Hp), f32).at[:, :H].set(params["embed"])

    return {"embed": embed_p,
            "w": wfused.astype(bf16), "b": b,
            "w12": w12.astype(bf16),
            "lin_wt": lin_wt.astype(bf16), "lin_b": lin_b,
            "H": H, "V": V, "Hp": Hp, "Vp": Vp, "L": num_layers, "TN": tn}


def prepare_encoder(packed, encoder_output, batch):
    """One-time per sequence: (T, B, H) seq-first -> (Bp, T, Hp) batch-first bf16."""
    H, Hp = packed["H"], packed["Hp"]
    T = encoder_output.shape[0]
    Bp = _round_up(batch, 8)
    enc = jnp.zeros((Bp, T, Hp), jnp.float32).at[:batch, :, :H].set(
        jnp.transpose(encoder_output, (1, 0, 2)))
    return enc.astype(jnp.bfloat16)


def pad_state(packed, s):
    """(L, B, H) -> padded (L, Bp, Hp) f32; done once, carry stays padded across steps."""
    L, B, H = s.shape
    Bp, Hp = _round_up(B, 8), packed["Hp"]
    return jnp.zeros((L, Bp, Hp), jnp.float32).at[:, :B, :H].set(s)


def unpad_state(packed, sp, batch):
    return sp[:, :batch, :packed["H"]]


def decoder_attention_step(packed, input_ids, h0p, c0p, enc_p):
    """Per-token hot path: embedding gather + one pallas_call.

    h0p / c0p and the returned h/c stay in the padded (L, Bp, Hp) layout so the
    autoregressive carry is never sliced and re-padded between decode steps.
    """
    H, V, Hp, Vp, L, TN = (packed[k] for k in ("H", "V", "Hp", "Vp", "L", "TN"))
    B = int(input_ids.shape[0])
    Bp = int(h0p.shape[1])
    T = int(enc_p.shape[1])
    NT = Vp // TN
    f32 = jnp.float32

    # TODO(synk): move this gather in-kernel (scalar-prefetch ids + row DMA from an
    # HBM-resident table) to drop the separate XLA gather and (Bp,Hp) HBM round trip.
    x = jnp.zeros((Bp, Hp), f32).at[:B].set(packed["embed"][input_ids])

    kernel = partial(decoder_attention_kernel, L, Hp, TN, NT)

    grid_spec = pltpu.PrefetchScalarGridSpec(
        num_scalar_prefetch=0,
        grid=(NT,),
        in_specs=[
            pl.BlockSpec((Bp, Hp), lambda j: (0, 0)),               # x (f32)
            pl.BlockSpec((L, Bp, Hp), lambda j: (0, 0, 0)),         # h0 (f32)
            pl.BlockSpec((L, Bp, Hp), lambda j: (0, 0, 0)),         # c0 (f32)
            pl.BlockSpec((Bp, T, Hp), lambda j: (0, 0, 0)),         # enc (bf16)
            pl.BlockSpec((L, 2 * Hp, 4 * Hp), lambda j: (0, 0, 0)), # fused LSTM W (bf16)
            pl.BlockSpec((L, 1, 4 * Hp), lambda j: (0, 0, 0)),      # fused bias (f32)
            pl.BlockSpec((2 * Hp, Hp), lambda j: (0, 0)),           # fused [W1;W2]^T (bf16)
            pl.BlockSpec((Hp, TN), lambda j: (0, j)),               # lin_w tile (bf16, streamed)
            pl.BlockSpec((1, TN), lambda j: (0, j)),                # lin_b tile (f32)
        ],
        out_specs=(
            pl.BlockSpec((Bp, Vp), lambda j: (0, 0)),               # probs (VMEM-resident)
            pl.BlockSpec((L, Bp, Hp), lambda j: (0, 0, 0)),         # h_n   (resident)
            pl.BlockSpec((L, Bp, Hp), lambda j: (0, 0, 0)),         # c_n   (resident)
        ),
        scratch_shapes=[
            pltpu.VMEM((Bp, 2 * Hp), f32),      # [x|h] / [out|ctx] staging
            pltpu.VMEM((Bp, Hp), f32),          # attn activation (cached across tiles)
            pltpu.VMEM((NT, Bp, TN), f32),      # raw logits slab
            pltpu.VMEM((Bp, 1), f32),           # running max
            pltpu.VMEM((Bp, 1), f32),           # running sum of exp
        ],
    )

    probs_p, hn_p, cn_p = pl.pallas_call(
        kernel,
        out_shape=(jax.ShapeDtypeStruct((Bp, Vp), f32),
                   jax.ShapeDtypeStruct((L, Bp, Hp), f32),
                   jax.ShapeDtypeStruct((L, Bp, Hp), f32)),
        grid_spec=grid_spec,
        compiler_params=pltpu.CompilerParams(
            dimension_semantics=("arbitrary",),   # vocab axis carries softmax state
            vmem_limit_bytes=32 * 1024 * 1024,    # raise for production H/V tile sizes
        ),
        # TODO(synk): inside a jitted autoregressive decode loop, donate the carry via
        # input_output_aliases={1: 1, 2: 2} and fold multiple steps into one call so
        # the weight DMA is amortized across tokens.
    )(x, h0p, c0p, enc_p,
      packed["w"], packed["b"], packed["w12"], packed["lin_wt"], packed["lin_b"])

    return probs_p[:B, :V], hn_p, cn_p


def reference_forward(params, input_ids, h0, c0, encoder_output):
    """Pure-JAX reference mirroring the PyTorch module (eval mode)."""
    x = params["embed"][input_ids]                                   # (B, H)
    L = h0.shape[0]
    hs, cs = [], []
    for l in range(L):
        h, c = h0[l], c0[l]

        def gate(g):
            return (x @ params["wih"][l, g].T + h @ params["whh"][l, g].T
                    + params["bih"][l, g] + params["bhh"][l, g])

        i = jax.nn.sigmoid(gate(0))
        f = jax.nn.sigmoid(gate(1))
        g_ = jnp.tanh(gate(2))
        o = jax.nn.sigmoid(gate(3))
        c_new = f * c + i * g_
        h_new = o * jnp.tanh(c_new)
        hs.append(h_new)
        cs.append(c_new)
        x = h_new
    out = x
    scores = jnp.sum(out[None, :, :] * encoder_output, axis=-1, keepdims=True)  # (T,B,1)
    ctx = jnp.sum(scores * encoder_output, axis=0)                               # (B,H)
    attn = jnp.tanh(out @ params["w1"].T + ctx @ params["w2"].T)
    logits = attn @ params["lin_w"].T + params["lin_b"]
    probs = jax.nn.softmax(logits, axis=1)
    return probs, (jnp.stack(hs), jnp.stack(cs))


if __name__ == "__main__":
    # Small, module-consistent shapes; V chosen so the vocab grid has several tiles.
    B = 4          # batch
    H = 32         # hid_dim == emb_dim
    V = 320        # vocab size  (-> Vp=384, 3 vocab tiles of 128)
    T = 8          # encoder sequence length
    L = 2          # num LSTM layers

    key = jax.random.PRNGKey(0)
    k_par, k_in, k_h, k_c, k_enc = jax.random.split(key, 5)

    params = init_params(k_par, V, H, L)
    packed = pack_params(params, L, tn=128)

    input_ids = jax.random.randint(k_in, (B,), 0, V)                       # (B,) token ids
    h0 = (jax.random.normal(k_h, (L, B, H)) * 0.1).astype(jnp.float32)     # (L, B, H)
    c0 = (jax.random.normal(k_c, (L, B, H)) * 0.1).astype(jnp.float32)     # (L, B, H)
    encoder_output = (jax.random.normal(k_enc, (T, B, H)) * 0.1).astype(jnp.float32)  # (T,B,H)

    # One-time prep outside the per-token hot path.
    enc_p = prepare_encoder(packed, encoder_output, B)
    h0p, c0p = pad_state(packed, h0), pad_state(packed, c0)

    probs, hn_p, cn_p = decoder_attention_step(packed, input_ids, h0p, c0p, enc_p)
    jax.block_until_ready((probs, hn_p, cn_p))

    h_n = unpad_state(packed, hn_p, B)
    c_n = unpad_state(packed, cn_p, B)

    assert probs.shape == (B, V)
    assert h_n.shape == (L, B, H) and c_n.shape == (L, B, H)
    # probabilities sum to 1 along the vocab axis (normalization is f32-exact)
    assert jnp.allclose(jnp.sum(probs, axis=1), 1.0, atol=1e-4)

    # numerical check against the pure-f32 reference (bf16 matmul operands -> looser tol)
    r_probs, (r_h, r_c) = reference_forward(params, input_ids, h0, c0, encoder_output)
    assert jnp.allclose(probs, r_probs, atol=2e-3, rtol=5e-2)
    assert jnp.allclose(h_n, r_h, atol=5e-3, rtol=5e-2)
    assert jnp.allclose(c_n, r_c, atol=5e-3, rtol=5e-2)

    print("KERNEL_OK")
</pallas_src>

<mosaic_0001>
module attributes {stable_mosaic.version = 11 : i64} {
  func.func @decoder_attention_kernel(%arg0: i32, %arg1: memref<8x128xf32, #tpu.memory_space<vmem>>, %arg2: memref<2x8x128xf32, #tpu.memory_space<vmem>>, %arg3: memref<2x8x128xf32, #tpu.memory_space<vmem>>, %arg4: memref<8x8x128xbf16, #tpu.memory_space<vmem>>, %arg5: memref<2x256x512xbf16, #tpu.memory_space<vmem>>, %arg6: memref<2x1x512xf32, #tpu.memory_space<vmem>>, %arg7: memref<256x128xbf16, #tpu.memory_space<vmem>>, %arg8: memref<128x128xbf16, #tpu.memory_space<vmem>>, %arg9: memref<1x128xf32, #tpu.memory_space<vmem>>, %arg10: memref<8x384xf32, #tpu.memory_space<vmem>>, %arg11: memref<2x8x128xf32, #tpu.memory_space<vmem>>, %arg12: memref<2x8x128xf32, #tpu.memory_space<vmem>>, %arg13: memref<8x256xf32, #tpu.memory_space<vmem>>, %arg14: memref<8x128xf32, #tpu.memory_space<vmem>>, %arg15: memref<3x8x128xf32, #tpu.memory_space<vmem>>, %arg16: memref<8x1xf32, #tpu.memory_space<vmem>>, %arg17: memref<8x1xf32, #tpu.memory_space<vmem>>) attributes {dimension_semantics = [#tpu.dimension_semantics<arbitrary>], iteration_bounds = array<i64: 3>, scalar_prefetch = 0 : i64, scratch_operands = 5 : i64, tpu.core_type = #tpu.core_type<tc>, window_params = [{pipeline_mode = #tpu.pipeline_mode<synchronous>, transform_indices = @transform_0, window_bounds = array<i64: 8, 128>}, {pipeline_mode = #tpu.pipeline_mode<synchronous>, transform_indices = @transform_1, window_bounds = array<i64: 2, 8, 128>}, {pipeline_mode = #tpu.pipeline_mode<synchronous>, transform_indices = @transform_2, window_bounds = array<i64: 2, 8, 128>}, {pipeline_mode = #tpu.pipeline_mode<synchronous>, transform_indices = @transform_3, window_bounds = array<i64: 8, 8, 128>}, {pipeline_mode = #tpu.pipeline_mode<synchronous>, transform_indices = @transform_4, window_bounds = array<i64: 2, 256, 512>}, {pipeline_mode = #tpu.pipeline_mode<synchronous>, transform_indices = @transform_5, window_bounds = array<i64: 2, 1, 512>}, {pipeline_mode = #tpu.pipeline_mode<synchronous>, transform_indices = @transform_6, window_bounds = array<i64: 256, 128>}, {transform_indices = @transform_7, window_bounds = array<i64: 128, 128>}, {transform_indices = @transform_8, window_bounds = array<i64: 1, 128>}, {pipeline_mode = #tpu.pipeline_mode<synchronous>, transform_indices = @transform_9, window_bounds = array<i64: 8, 384>}, {pipeline_mode = #tpu.pipeline_mode<synchronous>, transform_indices = @transform_10, window_bounds = array<i64: 2, 8, 128>}, {pipeline_mode = #tpu.pipeline_mode<synchronous>, transform_indices = @transform_11, window_bounds = array<i64: 2, 8, 128>}]} {
    %c0_i32 = arith.constant 0 : i32
    %0 = arith.cmpi eq, %arg0, %c0_i32 : i32
    %1 = arith.extui %0 : i1 to i32
    %c0_i32_0 = arith.constant 0 : i32
    %2 = arith.cmpi ne, %1, %c0_i32_0 : i32
    scf.if %2 {
      %c0_21 = arith.constant 0 : index
      %c0_22 = arith.constant 0 : index
      %34 = vector.load %arg1[%c0_21, %c0_22] : memref<8x128xf32, #tpu.memory_space<vmem>>, vector<8x128xf32>
      %c0_23 = arith.constant 0 : index
      %c0_24 = arith.constant 0 : index
      %c0_25 = arith.constant 0 : index
      %35 = vector.load %arg2[%c0_23, %c0_24, %c0_25] : memref<2x8x128xf32, #tpu.memory_space<vmem>>, vector<1x8x128xf32>
      %36 = vector.shape_cast %35 : vector<1x8x128xf32> to vector<8x128xf32>
      %c0_26 = arith.constant 0 : index
      %c0_27 = arith.constant 0 : index
      %c0_28 = arith.constant 0 : index
      %37 = vector.load %arg3[%c0_26, %c0_27, %c0_28] : memref<2x8x128xf32, #tpu.memory_space<vmem>>, vector<1x8x128xf32>
      %38 = vector.shape_cast %37 : vector<1x8x128xf32> to vector<8x128xf32>
      %c0_29 = arith.constant 0 : index
      %c0_30 = arith.constant 0 : index
      %39 = vector.load %arg13[%c0_29, %c0_30] : memref<8x256xf32, #tpu.memory_space<vmem>>, vector<8x128xf32>
      tpu.vector_store %arg13[%c0_29, %c0_30], %34 {strides = array<i32>} : memref<8x256xf32, #tpu.memory_space<vmem>>, vector<8x128xf32>,
      %c0_31 = arith.constant 0 : index
      %c128 = arith.constant 128 : index
      %40 = vector.load %arg13[%c0_31, %c128] : memref<8x256xf32, #tpu.memory_space<vmem>>, vector<8x128xf32>
      tpu.vector_store %arg13[%c0_31, %c128], %36 {strides = array<i32>} : memref<8x256xf32, #tpu.memory_space<vmem>>, vector<8x128xf32>,
      %c0_32 = arith.constant 0 : index
      %c0_33 = arith.constant 0 : index
      %41 = vector.load %arg13[%c0_32, %c0_33] : memref<8x256xf32, #tpu.memory_space<vmem>>, vector<8x256xf32>
      %42 = arith.truncf %41 : vector<8x256xf32> to vector<8x256xbf16>
      %c0_34 = arith.constant 0 : index
      %c0_35 = arith.constant 0 : index
      %c0_36 = arith.constant 0 : index
      %43 = vector.load %arg5[%c0_34, %c0_35, %c0_36] : memref<2x256x512xbf16, #tpu.memory_space<vmem>>, vector<1x256x512xbf16>
      %44 = vector.shape_cast %43 : vector<1x256x512xbf16> to vector<256x512xbf16>
      %cst_37 = arith.constant dense<0.000000e+00> : vector<8x512xf32>
      %45 = tpu.matmul %42, %44, %cst_37 {dimension_numbers = #tpu.dot_dimension_numbers<[1], [0], [0], [1], [0, 0, 1, 1], [], []>} : vector<8x256xbf16>, vector<256x512xbf16>, vector<8x512xf32> -> vector<8x512xf32>
      %c0_38 = arith.constant 0 : index
      %c0_39 = arith.constant 0 : index
      %c0_40 = arith.constant 0 : index
      %46 = vector.load %arg6[%c0_38, %c0_39, %c0_40] : memref<2x1x512xf32, #tpu.memory_space<vmem>>, vector<1x1x512xf32>
      %47 = vector.shape_cast %46 : vector<1x1x512xf32> to vector<1x512xf32>
      %48 = vector.broadcast %47 : vector<1x512xf32> to vector<8x512xf32>
      %49 = arith.addf %45, %48 : vector<8x512xf32>
      %50 = vector.extract_strided_slice %49 {offsets = [0, 0], sizes = [8, 128], strides = [1, 1]} : vector<8x512xf32> to vector<8x128xf32>
      %cst_41 = arith.constant 5.000000e-01 : f32
      %51 = vector.broadcast %cst_41 : f32 to vector<8x128xf32>
      %52 = arith.mulf %51, %50 : vector<8x128xf32>
      %53 = math.tanh %52 : vector<8x128xf32>
      %cst_42 = arith.constant 5.000000e-01 : f32
      %54 = vector.broadcast %cst_42 : f32 to vector<8x128xf32>
      %55 = arith.mulf %54, %53 : vector<8x128xf32>
      %cst_43 = arith.constant 5.000000e-01 : f32
      %56 = vector.broadcast %cst_43 : f32 to vector<8x128xf32>
      %57 = arith.addf %55, %56 : vector<8x128xf32>
      %58 = vector.extract_strided_slice %49 {offsets = [0, 128], sizes = [8, 128], strides = [1, 1]} : vector<8x512xf32> to vector<8x128xf32>
      %cst_44 = arith.constant 5.000000e-01 : f32
      %59 = vector.broadcast %cst_44 : f32 to vector<8x128xf32>
      %60 = arith.mulf %59, %58 : vector<8x128xf32>
      %61 = math.tanh %60 : vector<8x128xf32>
      %cst_45 = arith.constant 5.000000e-01 : f32
      %62 = vector.broadcast %cst_45 : f32 to vector<8x128xf32>
      %63 = arith.mulf %62, %61 : vector<8x128xf32>
      %cst_46 = arith.constant 5.000000e-01 : f32
      %64 = vector.broadcast %cst_46 : f32 to vector<8x128xf32>
      %65 = arith.addf %63, %64 : vector<8x128xf32>
      %66 = vector.extract_strided_slice %49 {offsets = [0, 256], sizes = [8, 128], strides = [1, 1]} : vector<8x512xf32> to vector<8x128xf32>
      %67 = math.tanh %66 : vector<8x128xf32>
      %68 = vector.extract_strided_slice %49 {offsets = [0, 384], sizes = [8, 128], strides = [1, 1]} : vector<8x512xf32> to vector<8x128xf32>
      %cst_47 = arith.constant 5.000000e-01 : f32
      %69 = vector.broadcast %cst_47 : f32 to vector<8x128xf32>
      %70 = arith.mulf %69, %68 : vector<8x128xf32>
      %71 = math.tanh %70 : vector<8x128xf32>
      %cst_48 = arith.constant 5.000000e-01 : f32
      %72 = vector.broadcast %cst_48 : f32 to vector<8x128xf32>
      %73 = arith.mulf %72, %71 : vector<8x128xf32>
      %cst_49 = arith.constant 5.000000e-01 : f32
      %74 = vector.broadcast %cst_49 : f32 to vector<8x128xf32>
      %75 = arith.addf %73, %74 : vector<8x128xf32>
      %76 = arith.mulf %65, %38 : vector<8x128xf32>
      %77 = arith.mulf %57, %67 : vector<8x128xf32>
      %78 = arith.addf %76, %77 : vector<8x128xf32>
      %79 = math.tanh %78 : vector<8x128xf32>
      %80 = arith.mulf %75, %79 : vector<8x128xf32>
      %c0_50 = arith.constant 0 : index
      %c0_51 = arith.constant 0 : index
      %c0_52 = arith.constant 0 : index
      %81 = vector.load %arg11[%c0_50, %c0_51, %c0_52] : memref<2x8x128xf32, #tpu.memory_space<vmem>>, vector<1x8x128xf32>
      %82 = vector.shape_cast %81 : vector<1x8x128xf32> to vector<8x128xf32>
      %83 = vector.shape_cast %80 : vector<8x128xf32> to vector<1x8x128xf32>
      tpu.vector_store %arg11[%c0_50, %c0_51, %c0_52], %83 {strides = array<i32>} : memref<2x8x128xf32, #tpu.memory_space<vmem>>, vector<1x8x128xf32>,
      %c0_53 = arith.constant 0 : index
      %c0_54 = arith.constant 0 : index
      %c0_55 = arith.constant 0 : index
      %84 = vector.load %arg12[%c0_53, %c0_54, %c0_55] : memref<2x8x128xf32, #tpu.memory_space<vmem>>, vector<1x8x128xf32>
      %85 = vector.shape_cast %84 : vector<1x8x128xf32> to vector<8x128xf32>
      %86 = vector.shape_cast %78 : vector<8x128xf32> to vector<1x8x128xf32>
      tpu.vector_store %arg12[%c0_53, %c0_54, %c0_55], %86 {strides = array<i32>} : memref<2x8x128xf32, #tpu.memory_space<vmem>>, vector<1x8x128xf32>,
      %c1 = arith.constant 1 : index
      %c0_56 = arith.constant 0 : index
      %c0_57 = arith.constant 0 : index
      %87 = vector.load %arg2[%c1, %c0_56, %c0_57] : memref<2x8x128xf32, #tpu.memory_space<vmem>>, vector<1x8x128xf32>
      %88 = vector.shape_cast %87 : vector<1x8x128xf32> to vector<8x128xf32>
      %c1_58 = arith.constant 1 : index
      %c0_59 = arith.constant 0 : index
      %c0_60 = arith.constant 0 : index
      %89 = vector.load %arg3[%c1_58, %c0_59, %c0_60] : memref<2x8x128xf32, #tpu.memory_space<vmem>>, vector<1x8x128xf32>
      %90 = vector.shape_cast %89 : vector<1x8x128xf32> to vector<8x128xf32>
      %c0_61 = arith.constant 0 : index
      %c0_62 = arith.constant 0 : index
      %91 = vector.load %arg13[%c0_61, %c0_62] : memref<8x256xf32, #tpu.memory_space<vmem>>, vector<8x128xf32>
      tpu.vector_store %arg13[%c0_61, %c0_62], %80 {strides = array<i32>} : memref<8x256xf32, #tpu.memory_space<vmem>>, vector<8x128xf32>,
      %c0_63 = arith.constant 0 : index
      %c128_64 = arith.constant 128 : index
      %92 = vector.load %arg13[%c0_63, %c128_64] : memref<8x256xf32, #tpu.memory_space<vmem>>, vector<8x128xf32>
      tpu.vector_store %arg13[%c0_63, %c128_64], %88 {strides = array<i32>} : memref<8x256xf32, #tpu.memory_space<vmem>>, vector<8x128xf32>,
      %c0_65 = arith.constant 0 : index
      %c0_66 = arith.constant 0 : index
      %93 = vector.load %arg13[%c0_65, %c0_66] : memref<8x256xf32, #tpu.memory_space<vmem>>, vector<8x256xf32>
      %94 = arith.truncf %93 : vector<8x256xf32> to vector<8x256xbf16>
      %c1_67 = arith.constant 1 : index
      %c0_68 = arith.constant 0 : index
      %c0_69 = arith.constant 0 : index
      %95 = vector.load %arg5[%c1_67, %c0_68, %c0_69] : memref<2x256x512xbf16, #tpu.memory_space<vmem>>, vector<1x256x512xbf16>
      %96 = vector.shape_cast %95 : vector<1x256x512xbf16> to vector<256x512xbf16>
      %cst_70 = arith.constant dense<0.000000e+00> : vector<8x512xf32>
      %97 = tpu.matmul %94, %96, %cst_70 {dimension_numbers = #tpu.dot_dimension_numbers<[1], [0], [0], [1], [0, 0, 1, 1], [], []>} : vector<8x256xbf16>, vector<256x512xbf16>, vector<8x512xf32> -> vector<8x512xf32>
      %c1_71 = arith.constant 1 : index
      %c0_72 = arith.constant 0 : index
      %c0_73 = arith.constant 0 : index
      %98 = vector.load %arg6[%c1_71, %c0_72, %c0_73] : memref<2x1x512xf32, #tpu.memory_space<vmem>>, vector<1x1x512xf32>
      %99 = vector.shape_cast %98 : vector<1x1x512xf32> to vector<1x512xf32>
      %100 = vector.broadcast %99 : vector<1x512xf32> to vector<8x512xf32>
      %101 = arith.addf %97, %100 : vector<8x512xf32>
      %102 = vector.extract_strided_slice %101 {offsets = [0, 0], sizes = [8, 128], strides = [1, 1]} : vector<8x512xf32> to vector<8x128xf32>
      %cst_74 = arith.constant 5.000000e-01 : f32
      %103 = vector.broadcast %cst_74 : f32 to vector<8x128xf32>
      %104 = arith.mulf %103, %102 : vector<8x128xf32>
      %105 = math.tanh %104 : vector<8x128xf32>
      %cst_75 = arith.constant 5.000000e-01 : f32
      %106 = vector.broadcast %cst_75 : f32 to vector<8x128xf32>
      %107 = arith.mulf %106, %105 : vector<8x128xf32>
      %cst_76 = arith.constant 5.000000e-01 : f32
      %108 = vector.broadcast %cst_76 : f32 to vector<8x128xf32>
      %109 = arith.addf %107, %108 : vector<8x128xf32>
      %110 = vector.extract_strided_slice %101 {offsets = [0, 128], sizes = [8, 128], strides = [1, 1]} : vector<8x512xf32> to vector<8x128xf32>
      %cst_77 = arith.constant 5.000000e-01 : f32
      %111 = vector.broadcast %cst_77 : f32 to vector<8x128xf32>
      %112 = arith.mulf %111, %110 : vector<8x128xf32>
      %113 = math.tanh %112 : vector<8x128xf32>
      %cst_78 = arith.constant 5.000000e-01 : f32
      %114 = vector.broadcast %cst_78 : f32 to vector<8x128xf32>
      %115 = arith.mulf %114, %113 : vector<8x128xf32>
      %cst_79 = arith.constant 5.000000e-01 : f32
      %116 = vector.broadcast %cst_79 : f32 to vector<8x128xf32>
      %117 = arith.addf %115, %116 : vector<8x128xf32>
      %118 = vector.extract_strided_slice %101 {offsets = [0, 256], sizes = [8, 128], strides = [1, 1]} : vector<8x512xf32> to vector<8x128xf32>
      %119 = math.tanh %118 : vector<8x128xf32>
      %120 = vector.extract_strided_slice %101 {offsets = [0, 384], sizes = [8, 128], strides = [1, 1]} : vector<8x512xf32> to vector<8x128xf32>
      %cst_80 = arith.constant 5.000000e-01 : f32
      %121 = vector.broadcast %cst_80 : f32 to vector<8x128xf32>
      %122 = arith.mulf %121, %120 : vector<8x128xf32>
      %123 = math.tanh %122 : vector<8x128xf32>
      %cst_81 = arith.constant 5.000000e-01 : f32
      %124 = vector.broadcast %cst_81 : f32 to vector<8x128xf32>
      %125 = arith.mulf %124, %123 : vector<8x128xf32>
      %cst_82 = arith.constant 5.000000e-01 : f32
      %126 = vector.broadcast %cst_82 : f32 to vector<8x128xf32>
      %127 = arith.addf %125, %126 : vector<8x128xf32>
      %128 = arith.mulf %117, %90 : vector<8x128xf32>
      %129 = arith.mulf %109, %119 : vector<8x128xf32>
      %130 = arith.addf %128, %129 : vector<8x128xf32>
      %131 = math.tanh %130 : vector<8x128xf32>
      %132 = arith.mulf %127, %131 : vector<8x128xf32>
      %c1_83 = arith.constant 1 : index
      %c0_84 = arith.constant 0 : index
      %c0_85 = arith.constant 0 : index
      %133 = vector.load %arg11[%c1_83, %c0_84, %c0_85] : memref<2x8x128xf32, #tpu.memory_space<vmem>>, vector<1x8x128xf32>
      %134 = vector.shape_cast %133 : vector<1x8x128xf32> to vector<8x128xf32>
      %135 = vector.shape_cast %132 : vector<8x128xf32> to vector<1x8x128xf32>
      tpu.vector_store %arg11[%c1_83, %c0_84, %c0_85], %135 {strides = array<i32>} : memref<2x8x128xf32, #tpu.memory_space<vmem>>, vector<1x8x128xf32>,
      %c1_86 = arith.constant 1 : index
      %c0_87 = arith.constant 0 : index
      %c0_88 = arith.constant 0 : index
      %136 = vector.load %arg12[%c1_86, %c0_87, %c0_88] : memref<2x8x128xf32, #tpu.memory_space<vmem>>, vector<1x8x128xf32>
      %137 = vector.shape_cast %136 : vector<1x8x128xf32> to vector<8x128xf32>
      %138 = vector.shape_cast %130 : vector<8x128xf32> to vector<1x8x128xf32>
      tpu.vector_store %arg12[%c1_86, %c0_87, %c0_88], %138 {strides = array<i32>} : memref<2x8x128xf32, #tpu.memory_space<vmem>>, vector<1x8x128xf32>,
      %c0_89 = arith.constant 0 : index
      %c0_90 = arith.constant 0 : index
      %c0_91 = arith.constant 0 : index
      %139 = vector.load %arg4[%c0_89, %c0_90, %c0_91] : memref<8x8x128xbf16, #tpu.memory_space<vmem>>, vector<8x8x128xbf16>
      %140 = arith.extf %139 : vector<8x8x128xbf16> to vector<8x8x128xf32>
      %141 = vector.shape_cast %132 : vector<8x128xf32> to vector<8x1x128xf32>
      %142 = vector.broadcast %141 : vector<8x1x128xf32> to vector<8x8x128xf32>
      %143 = arith.mulf %142, %140 : vector<8x8x128xf32>
      %cst_92 = arith.constant dense<0.000000e+00> : vector<8x8xf32>
      %144 = vector.multi_reduction <add>, %143, %cst_92 [2] : vector<8x8x128xf32> to vector<8x8xf32>
      %145 = vector.shape_cast %144 : vector<8x8xf32> to vector<8x8x1xf32>
      %146 = vector.broadcast %145 : vector<8x8x1xf32> to vector<8x8x128xf32>
      %147 = arith.mulf %146, %140 : vector<8x8x128xf32>
      %cst_93 = arith.constant dense<0.000000e+00> : vector<8x128xf32>
      %148 = vector.multi_reduction <add>, %147, %cst_93 [1] : vector<8x8x128xf32> to vector<8x128xf32>
      %c0_94 = arith.constant 0 : index
      %c0_95 = arith.constant 0 : index
      %149 = vector.load %arg13[%c0_94, %c0_95] : memref<8x256xf32, #tpu.memory_space<vmem>>, vector<8x128xf32>
      tpu.vector_store %arg13[%c0_94, %c0_95], %132 {strides = array<i32>} : memref<8x256xf32, #tpu.memory_space<vmem>>, vector<8x128xf32>,
      %c0_96 = arith.constant 0 : index
      %c128_97 = arith.constant 128 : index
      %150 = vector.load %arg13[%c0_96, %c128_97] : memref<8x256xf32, #tpu.memory_space<vmem>>, vector<8x128xf32>
      tpu.vector_store %arg13[%c0_96, %c128_97], %148 {strides = array<i32>} : memref<8x256xf32, #tpu.memory_space<vmem>>, vector<8x128xf32>,
      %c0_98 = arith.constant 0 : index
      %c0_99 = arith.constant 0 : index
      %151 = vector.load %arg13[%c0_98, %c0_99] : memref<8x256xf32, #tpu.memory_space<vmem>>, vector<8x256xf32>
      %152 = arith.truncf %151 : vector<8x256xf32> to vector<8x256xbf16>
      %c0_100 = arith.constant 0 : index
      %c0_101 = arith.constant 0 : index
      %153 = vector.load %arg7[%c0_100, %c0_101] : memref<256x128xbf16, #tpu.memory_space<vmem>>, vector<256x128xbf16>
      %cst_102 = arith.constant dense<0.000000e+00> : vector<8x128xf32>
      %154 = tpu.matmul %152, %153, %cst_102 {dimension_numbers = #tpu.dot_dimension_numbers<[1], [0], [0], [1], [0, 0, 1, 1], [], []>} : vector<8x256xbf16>, vector<256x128xbf16>, vector<8x128xf32> -> vector<8x128xf32>
      %155 = math.tanh %154 : vector<8x128xf32>
      %c0_103 = arith.constant 0 : index
      %c0_104 = arith.constant 0 : index
      %156 = vector.load %arg14[%c0_103, %c0_104] : memref<8x128xf32, #tpu.memory_space<vmem>>, vector<8x128xf32>
      tpu.vector_store %arg14[%c0_103, %c0_104], %155 {strides = array<i32>} : memref<8x128xf32, #tpu.memory_space<vmem>>, vector<8x128xf32>,
      %cst_105 = arith.constant 0xFF800000 : f32
      %157 = vector.broadcast %cst_105 : f32 to vector<8x1xf32>
      %c0_106 = arith.constant 0 : index
      %c0_107 = arith.constant 0 : index
      %158 = vector.load %arg16[%c0_106, %c0_107] : memref<8x1xf32, #tpu.memory_space<vmem>>, vector<8x1xf32>
      tpu.vector_store %arg16[%c0_106, %c0_107], %157 {strides = array<i32>} : memref<8x1xf32, #tpu.memory_space<vmem>>, vector<8x1xf32>,
      %cst_108 = arith.constant 0.000000e+00 : f32
      %159 = vector.broadcast %cst_108 : f32 to vector<8x1xf32>
      %c0_109 = arith.constant 0 : index
      %c0_110 = arith.constant 0 : index
      %160 = vector.load %arg17[%c0_109, %c0_110] : memref<8x1xf32, #tpu.memory_space<vmem>>, vector<8x1xf32>
      tpu.vector_store %arg17[%c0_109, %c0_110], %159 {strides = array<i32>} : memref<8x1xf32, #tpu.memory_space<vmem>>, vector<8x1xf32>,
    } else {
    }
    %c0 = arith.constant 0 : index
    %c0_1 = arith.constant 0 : index
    %3 = vector.load %arg14[%c0, %c0_1] : memref<8x128xf32, #tpu.memory_space<vmem>>, vector<8x128xf32>
    %4 = arith.truncf %3 : vector<8x128xf32> to vector<8x128xbf16>
    %c0_2 = arith.constant 0 : index
    %c0_3 = arith.constant 0 : index
    %5 = vector.load %arg8[%c0_2, %c0_3] : memref<128x128xbf16, #tpu.memory_space<vmem>>, vector<128x128xbf16>
    %cst = arith.constant dense<0.000000e+00> : vector<8x128xf32>
    %6 = tpu.matmul %4, %5, %cst {dimension_numbers = #tpu.dot_dimension_numbers<[1], [0], [0], [1], [0, 0, 1, 1], [], []>} : vector<8x128xbf16>, vector<128x128xbf16>, vector<8x128xf32> -> vector<8x128xf32>
    %c0_4 = arith.constant 0 : index
    %c0_5 = arith.constant 0 : index
    %7 = vector.load %arg9[%c0_4, %c0_5] : memref<1x128xf32, #tpu.memory_space<vmem>>, vector<1x128xf32>
    %8 = vector.broadcast %7 : vector<1x128xf32> to vector<8x128xf32>
    %9 = arith.addf %6, %8 : vector<8x128xf32>
    %10 = arith.index_cast %arg0 : i32 to index
    %c0_6 = arith.constant 0 : index
    %c0_7 = arith.constant 0 : index
    %11 = vector.load %arg15[%10, %c0_6, %c0_7] : memref<3x8x128xf32, #tpu.memory_space<vmem>>, vector<1x8x128xf32>
    %12 = vector.shape_cast %11 : vector<1x8x128xf32> to vector<8x128xf32>
    %13 = vector.shape_cast %9 : vector<8x128xf32> to vector<1x8x128xf32>
    tpu.vector_store %arg15[%10, %c0_6, %c0_7], %13 {strides = array<i32>} : memref<3x8x128xf32, #tpu.memory_space<vmem>>, vector<1x8x128xf32>,
    %c0_8 = arith.constant 0 : index
    %c0_9 = arith.constant 0 : index
    %14 = vector.load %arg16[%c0_8, %c0_9] : memref<8x1xf32, #tpu.memory_space<vmem>>, vector<8x1xf32>
    %cst_10 = arith.constant dense<0xFF800000> : vector<8xf32>
    %15 = vector.multi_reduction <maximumf>, %9, %cst_10 [1] : vector<8x128xf32> to vector<8xf32>
    %16 = vector.shape_cast %15 : vector<8xf32> to vector<8x1xf32>
    %17 = arith.maximumf %14, %16 : vector<8x1xf32>
    %c0_11 = arith.constant 0 : index
    %c0_12 = arith.constant 0 : index
    %18 = vector.load %arg17[%c0_11, %c0_12] : memref<8x1xf32, #tpu.memory_space<vmem>>, vector<8x1xf32>
    %c0_13 = arith.constant 0 : index
    %c0_14 = arith.constant 0 : index
    %19 = vector.load %arg16[%c0_13, %c0_14] : memref<8x1xf32, #tpu.memory_space<vmem>>, vector<8x1xf32>
    %20 = arith.subf %19, %17 : vector<8x1xf32>
    %21 = math.exp %20 : vector<8x1xf32>
    %22 = arith.mulf %18, %21 : vector<8x1xf32>
    %23 = vector.broadcast %17 : vector<8x1xf32> to vector<8x128xf32>
    %24 = arith.subf %9, %23 : vector<8x128xf32>
    %25 = math.exp %24 : vector<8x128xf32>
    %cst_15 = arith.constant dense<0.000000e+00> : vector<8xf32>
    %26 = vector.multi_reduction <add>, %25, %cst_15 [1] : vector<8x128xf32> to vector<8xf32>
    %27 = vector.shape_cast %26 : vector<8xf32> to vector<8x1xf32>
    %28 = arith.addf %22, %27 : vector<8x1xf32>
    %c0_16 = arith.constant 0 : index
    %c0_17 = arith.constant 0 : index
    %29 = vector.load %arg17[%c0_16, %c0_17] : memref<8x1xf32, #tpu.memory_space<vmem>>, vector<8x1xf32>
    tpu.vector_store %arg17[%c0_16, %c0_17], %28 {strides = array<i32>} : memref<8x1xf32, #tpu.memory_space<vmem>>, vector<8x1xf32>,
    %c0_18 = arith.constant 0 : index
    %c0_19 = arith.constant 0 : index
    %30 = vector.load %arg16[%c0_18, %c0_19] : memref<8x1xf32, #tpu.memory_space<vmem>>, vector<8x1xf32>
    tpu.vector_store %arg16[%c0_18, %c0_19], %17 {strides = array<i32>} : memref<8x1xf32, #tpu.memory_space<vmem>>, vector<8x1xf32>,
    %c2_i32 = arith.constant 2 : i32
    %31 = arith.cmpi eq, %arg0, %c2_i32 : i32
    %32 = arith.extui %31 : i1 to i32
    %c0_i32_20 = arith.constant 0 : i32
    %33 = arith.cmpi ne, %32, %c0_i32_20 : i32
    scf.if %33 {
      %c0_21 = arith.constant 0 : index
      %c0_22 = arith.constant 0 : index
      %34 = vector.load %arg17[%c0_21, %c0_22] : memref<8x1xf32, #tpu.memory_space<vmem>>, vector<8x1xf32>
      %35 = tpu.reciprocal %34 {approx = true} : vector<8x1xf32> -> vector<8x1xf32>
      %36 = arith.mulf %34, %35 : vector<8x1xf32>
      %cst_23 = arith.constant 2.000000e+00 : f32
      %37 = vector.broadcast %cst_23 : f32 to vector<8x1xf32>
      %38 = arith.subf %37, %36 : vector<8x1xf32>
      %39 = arith.mulf %35, %38 : vector<8x1xf32>
      %c0_24 = arith.constant 0 : index
      %c0_25 = arith.constant 0 : index
      %40 = vector.load %arg16[%c0_24, %c0_25] : memref<8x1xf32, #tpu.memory_space<vmem>>, vector<8x1xf32>
      %c0_26 = arith.constant 0 : index
      %c0_27 = arith.constant 0 : index
      %c0_28 = arith.constant 0 : index
      %41 = vector.load %arg15[%c0_26, %c0_27, %c0_28] : memref<3x8x128xf32, #tpu.memory_space<vmem>>, vector<1x8x128xf32>
      %42 = vector.shape_cast %41 : vector<1x8x128xf32> to vector<8x128xf32>
      %43 = vector.broadcast %40 : vector<8x1xf32> to vector<8x128xf32>
      %44 = arith.subf %42, %43 : vector<8x128xf32>
      %45 = math.exp %44 : vector<8x128xf32>
      %46 = vector.broadcast %39 : vector<8x1xf32> to vector<8x128xf32>
      %47 = arith.mulf %45, %46 : vector<8x128xf32>
      %c0_29 = arith.constant 0 : index
      %c0_30 = arith.constant 0 : index
      %48 = vector.load %arg10[%c0_29, %c0_30] : memref<8x384xf32, #tpu.memory_space<vmem>>, vector<8x128xf32>
      tpu.vector_store %arg10[%c0_29, %c0_30], %47 {strides = array<i32>} : memref<8x384xf32, #tpu.memory_space<vmem>>, vector<8x128xf32>,
      %c1 = arith.constant 1 : index
      %c0_31 = arith.constant 0 : index
      %c0_32 = arith.constant 0 : index
      %49 = vector.load %arg15[%c1, %c0_31, %c0_32] : memref<3x8x128xf32, #tpu.memory_space<vmem>>, vector<1x8x128xf32>
      %50 = vector.shape_cast %49 : vector<1x8x128xf32> to vector<8x128xf32>
      %51 = vector.broadcast %40 : vector<8x1xf32> to vector<8x128xf32>
      %52 = arith.subf %50, %51 : vector<8x128xf32>
      %53 = math.exp %52 : vector<8x128xf32>
      %54 = vector.broadcast %39 : vector<8x1xf32> to vector<8x128xf32>
      %55 = arith.mulf %53, %54 : vector<8x128xf32>
      %c0_33 = arith.constant 0 : index
      %c128 = arith.constant 128 : index
      %56 = vector.load %arg10[%c0_33, %c128] : memref<8x384xf32, #tpu.memory_space<vmem>>, vector<8x128xf32>
      tpu.vector_store %arg10[%c0_33, %c128], %55 {strides = array<i32>} : memref<8x384xf32, #tpu.memory_space<vmem>>, vector<8x128xf32>,
      %c2 = arith.constant 2 : index
      %c0_34 = arith.constant 0 : index
      %c0_35 = arith.constant 0 : index
      %57 = vector.load %arg15[%c2, %c0_34, %c0_35] : memref<3x8x128xf32, #tpu.memory_space<vmem>>, vector<1x8x128xf32>
      %58 = vector.shape_cast %57 : vector<1x8x128xf32> to vector<8x128xf32>
      %59 = vector.broadcast %40 : vector<8x1xf32> to vector<8x128xf32>
      %60 = arith.subf %58, %59 : vector<8x128xf32>
      %61 = math.exp %60 : vector<8x128xf32>
      %62 = vector.broadcast %39 : vector<8x1xf32> to vector<8x128xf32>
      %63 = arith.mulf %61, %62 : vector<8x128xf32>
      %c0_36 = arith.constant 0 : index
      %c256 = arith.constant 256 : index
      %64 = vector.load %arg10[%c0_36, %c256] : memref<8x384xf32, #tpu.memory_space<vmem>>, vector<8x128xf32>
      tpu.vector_store %arg10[%c0_36, %c256], %63 {strides = array<i32>} : memref<8x384xf32, #tpu.memory_space<vmem>>, vector<8x128xf32>,
    } else {
    }
    return
  }
  func.func @transform_0(%arg0: i32) -> (i32, i32) {
    %c0_i32 = arith.constant 0 : i32
    %c0_i32_0 = arith.constant 0 : i32
    %c0_i32_1 = arith.constant 0 : i32
    return %c0_i32, %c0_i32_0 : i32, i32
  }
  func.func @transform_1(%arg0: i32) -> (i32, i32, i32) {
    %c0_i32 = arith.constant 0 : i32
    %c0_i32_0 = arith.constant 0 : i32
    %c0_i32_1 = arith.constant 0 : i32
    %c0_i32_2 = arith.constant 0 : i32
    return %c0_i32, %c0_i32_0, %c0_i32_1 : i32, i32, i32
  }
  func.func @transform_2(%arg0: i32) -> (i32, i32, i32) {
    %c0_i32 = arith.constant 0 : i32
    %c0_i32_0 = arith.constant 0 : i32
    %c0_i32_1 = arith.constant 0 : i32
    %c0_i32_2 = arith.constant 0 : i32
    return %c0_i32, %c0_i32_0, %c0_i32_1 : i32, i32, i32
  }
  func.func @transform_3(%arg0: i32) -> (i32, i32, i32) {
    %c0_i32 = arith.constant 0 : i32
    %c0_i32_0 = arith.constant 0 : i32
    %c0_i32_1 = arith.constant 0 : i32
    %c0_i32_2 = arith.constant 0 : i32
    return %c0_i32, %c0_i32_0, %c0_i32_1 : i32, i32, i32
  }
  func.func @transform_4(%arg0: i32) -> (i32, i32, i32) {
    %c0_i32 = arith.constant 0 : i32
    %c0_i32_0 = arith.constant 0 : i32
    %c0_i32_1 = arith.constant 0 : i32
    %c0_i32_2 = arith.constant 0 : i32
    return %c0_i32, %c0_i32_0, %c0_i32_1 : i32, i32, i32
  }
  func.func @transform_5(%arg0: i32) -> (i32, i32, i32) {
    %c0_i32 = arith.constant 0 : i32
    %c0_i32_0 = arith.constant 0 : i32
    %c0_i32_1 = arith.constant 0 : i32
    %c0_i32_2 = arith.constant 0 : i32
    return %c0_i32, %c0_i32_0, %c0_i32_1 : i32, i32, i32
  }
  func.func @transform_6(%arg0: i32) -> (i32, i32) {
    %c0_i32 = arith.constant 0 : i32
    %c0_i32_0 = arith.constant 0 : i32
    %c0_i32_1 = arith.constant 0 : i32
    return %c0_i32, %c0_i32_0 : i32, i32
  }
  func.func @transform_7(%arg0: i32) -> (i32, i32) {
    %c0_i32 = arith.constant 0 : i32
    %c0_i32_0 = arith.constant 0 : i32
    return %c0_i32, %arg0 : i32, i32
  }
  func.func @transform_8(%arg0: i32) -> (i32, i32) {
    %c0_i32 = arith.constant 0 : i32
    %c0_i32_0 = arith.constant 0 : i32
    return %c0_i32, %arg0 : i32, i32
  }
  func.func @transform_9(%arg0: i32) -> (i32, i32) {
    %c0_i32 = arith.constant 0 : i32
    %c0_i32_0 = arith.constant 0 : i32
    %c0_i32_1 = arith.constant 0 : i32
    return %c0_i32, %c0_i32_0 : i32, i32
  }
  func.func @transform_10(%arg0: i32) -> (i32, i32, i32) {
    %c0_i32 = arith.constant 0 : i32
    %c0_i32_0 = arith.constant 0 : i32
    %c0_i32_1 = arith.constant 0 : i32
    %c0_i32_2 = arith.constant 0 : i32
    return %c0_i32, %c0_i32_0, %c0_i32_1 : i32, i32, i32
  }
  func.func @transform_11(%arg0: i32) -> (i32, i32, i32) {
    %c0_i32 = arith.constant 0 : i32
    %c0_i32_0 = arith.constant 0 : i32
    %c0_i32_1 = arith.constant 0 : i32
    %c0_i32_2 = arith.constant 0 : i32
    return %c0_i32, %c0_i32_0, %c0_i32_1 : i32, i32, i32
  }
}

</mosaic_0001>

<llo_original>
// kernel: tpu_custom_call.1
$region0: #{tpu_custom_call.1}
  #allocation0 [shape = 'u32[]', space=smem, size = 0x4, offset = 0x4, fixed_abs, tag = 'smem constant byte address 0x4 - core index']
  #allocation1 [shape = 'u32[144,128]{1,0:T(1,128)}', space=vmem, size = 0x12000, scoped, tag = 'internal scratch']
  #allocation2 [shape = 'f32[8,256]{1,0:T(8,128)}', space=vmem, size = 0x2000, scoped, tag = 'scratch operand']
  #allocation3 [shape = 'f32[8,128]{1,0:T(8,128)}', space=vmem, size = 0x1000, scoped, tag = 'scratch operand']
  #allocation4 [shape = 'f32[3,8,128]{2,1,0:T(8,128)}', space=vmem, size = 0x3000, scoped, tag = 'scratch operand']
  #allocation5 [shape = 'f32[8,1]{1,0:T(8,128)}', space=vmem, size = 0x1000, scoped, tag = 'scratch operand']
  #allocation6 [shape = 'f32[8,1]{1,0:T(8,128)}', space=vmem, size = 0x1000, scoped, tag = 'scratch operand']
  %s0 = inlined_call_operand.hbm [shape: f32[8,128], index: 0, kind: input, shape index: {}]
  %s1 = inlined_call_operand.hbm [shape: f32[2,8,128], index: 1, kind: input, shape index: {}]
  %s2 = inlined_call_operand.hbm [shape: f32[2,8,128], index: 2, kind: input, shape index: {}]
  %s3 = inlined_call_operand.hbm [shape: bf16[8,8,128], index: 3, kind: input, shape index: {}]
  %s4 = inlined_call_operand.hbm [shape: bf16[2,256,512], index: 4, kind: input, shape index: {}]
  %s5 = inlined_call_operand.vmem [shape: f32[2,1,512], index: 5, kind: input, shape index: {}]
  %s6 = inlined_call_operand.hbm [shape: bf16[256,128], index: 6, kind: input, shape index: {}]
  %s7 = inlined_call_operand.hbm [shape: bf16[128,384], index: 7, kind: input, shape index: {}]
  %s8 = inlined_call_operand.vmem [shape: f32[1,384], index: 8, kind: input, shape index: {}]
  %s9 = inlined_call_operand.hbm [shape: f32[8,384], index: 9, kind: output, shape index: {0}]
  %s10 = inlined_call_operand.hbm [shape: f32[2,8,128], index: 10, kind: output, shape index: {1}]
  %s11 = inlined_call_operand.hbm [shape: f32[2,8,128], index: 11, kind: output, shape index: {2}]
  %12 = xla_tuple %s9, %s10, %s11
  %s13 = sld [smem:[#allocation0]]
  $region121: #{tpu_custom_call.1} parent=0
    _
  %s15 = ssub.s32 1, %s13
  %s16 = scalar_select 0, %s15, %s13
  $region1: #{tpu_custom_call.1} parent=0
    #allocation7 [shape = 'u8[4096]{0}', space=vmem, size = 0x1000, scoped, tag = 'input window, operand 0, single buffered']
    #allocation8 [shape = 's32[2]{0}', space=sflag, size = 0x8, scoped, tag = 'scoped memory for tpu_custom_call.1']
    #allocation9 [shape = 's32[2]{0}', space=sflag, size = 0x8, scoped, tag = 'scoped memory for tpu_custom_call.1']
    #allocation10 [shape = 'u8[8192]{0}', space=vmem, size = 0x2000, scoped, tag = 'input window, operand 1, single buffered']
    #allocation11 [shape = 's32[1]{0}', space=sflag, size = 0x4, scoped, tag = 'scoped memory for tpu_custom_call.1']
    #allocation12 [shape = 'u8[8192]{0}', space=vmem, size = 0x2000, scoped, tag = 'input window, operand 2, single buffered']
    #allocation13 [shape = 'u8[16384]{0}', space=vmem, size = 0x4000, scoped, tag = 'input window, operand 3, single buffered']
    #allocation14 [shape = 's32[1]{0}', space=sflag, size = 0x4, scoped, tag = 'scoped memory for tpu_custom_call.1']
    #allocation15 [shape = 'u8[524288]{0}', space=vmem, size = 0x80000, scoped, tag = 'input window, operand 4, single buffered']
    #allocation16 [shape = 'u8[65536]{0}', space=vmem, size = 0x10000, scoped, tag = 'input window, operand 6, single buffered']
    #allocation17 [shape = 's32[1]{0}', space=sflag, size = 0x4, scoped, tag = 'scoped memory for tpu_custom_call.1']
    #allocation18 [shape = 'u8[65536]{0}', space=vmem, size = 0x10000, scoped, tag = 'input window, operand 7']
    #allocation19 [shape = 'u8[12288]{0}', space=vmem, size = 0x3000, scoped, tag = 'output window, operand 0, single buffered']
    #allocation20 [shape = 'u8[8192]{0}', space=vmem, size = 0x2000, scoped, tag = 'output window, operand 1, single buffered']
    #allocation21 [shape = 's32[1]{0}', space=sflag, size = 0x4, scoped, tag = 'scoped memory for tpu_custom_call.1']
    #allocation22 [shape = 'u8[8192]{0}', space=vmem, size = 0x2000, scoped, tag = 'output window, operand 2, single buffered']
    %17 = vsyncpa [#allocation8], 0
    %18 = vsyncpa [#allocation11], 0
    %19 = vsyncpa [#allocation14], 0
    %20 = vsyncpa [#allocation17], 0
    %21 = vsyncpa [#allocation9], 0
    %22 = vsyncpa [#allocation21], 0
    loop: start=0, step=1, limit=5
    $region2: #{tpu_custom_call.1} parent=1 // loop_pre_header
      _
    $region3: #{tpu_custom_call.1} parent=1 // loop_header
      %s24 = sphi 0, %s28
      %p25 = scmp.ge.s32.totalorder %s24, 5
      %s32 = sphi 0, %s32
      %s34 = sphi 0, %s32
      %s35 = sphi 0, %s34
      %s49 = sphi 0, %s35
      %s53 = sphi 0, %s53
      %s55 = sphi 0, %s53
      %s56 = sphi 0, %s55
      %s70 = sphi 0, %s56
      %s74 = sphi 0, %s74
      %s76 = sphi 0, %s74
      %s77 = sphi 0, %s76
      %s91 = sphi 0, %s77
      %s95 = sphi 0, %s95
      %s97 = sphi 0, %s95
      %s98 = sphi 0, %s97
      %s112 = sphi 0, %s98
      %s116 = sphi 0, %s116
      %s118 = sphi 0, %s116
      %s119 = sphi 0, %s118
      %s133 = sphi 0, %s119
      %s137 = sphi 0, %s137
      %s139 = sphi 0, %s137
      %s140 = sphi 0, %s139
      %s154 = sphi 0, %s140
      %s158 = sphi 0, %s158
      %s160 = sphi 0, %s158
      %s161 = sphi 0, %s160
      %s175 = sphi 0, %s161
      %s181 = sphi 0, %s183
      %s184 = sphi 0, %s181
      %s185 = sphi 0, %s184
      %s201 = sphi 0, %s185
      %s207 = sphi 0, %s209
      %s210 = sphi 0, %s207
      %s211 = sphi 0, %s210
      %s227 = sphi 0, %s211
      %s231 = sphi 0, %s231
      %s233 = sphi 0, %s231
      %s234 = sphi 0, %s233
      %s248 = sphi 0, %s234
      %s252 = sphi 0, %s252
      %s254 = sphi 0, %s252
      %s255 = sphi 0, %s254
      %s269 = sphi 0, %s255
      %s273 = sphi 0, %s273
      %s275 = sphi 0, %s273
      %s276 = sphi 0, %s275
      %s290 = sphi 0, %s276
    $region4: #{tpu_custom_call.1} parent=1 // loop_header_branch
      %27 = sbr.rel (%p25) target = $region8
    $region5: #{tpu_custom_call.1} parent=1 // loop_body
      %s29 = ssub.s32 %s24, 1
      %s30 = ssub.s32 %s24, 2
      %s31 = sadd.s32 %s24, 1
      %s33 = sadd.s32 %s32, 1
      %p36 = scmp.eq.s32.totalorder %s24, 2
      %p37 = scmp.ne.s32.totalorder %s32, %s34
      %p38 = scmp.eq.s32.totalorder %s24, 0
      %p39 = por %p37, %p38
      %p40 = scmp.ne.s32.totalorder %s32, %s34
      %p41 = scmp.eq.s32.totalorder %s29, 2
      %p42 = por %p40, %p41
      %p43 = scmp.ne.s32.totalorder %s34, %s35
      %p44 = scmp.eq.s32.totalorder %s29, 0
      %p45 = por %p43, %p44
      %p46 = scmp.ne.s32.totalorder %s34, %s35
      %p47 = scmp.eq.s32.totalorder %s30, 2
      %p48 = por %p46, %p47
      %p50 = scmp.ne.s32.totalorder %s35, %s49
      %p51 = scmp.eq.s32.totalorder %s30, 0
      %p52 = por %p50, %p51
      %s54 = sadd.s32 %s53, 1
      %p57 = scmp.eq.s32.totalorder %s24, 2
      %p58 = scmp.ne.s32.totalorder %s53, %s55
      %p59 = scmp.eq.s32.totalorder %s24, 0
      %p60 = por %p58, %p59
      %p61 = scmp.ne.s32.totalorder %s53, %s55
      %p62 = scmp.eq.s32.totalorder %s29, 2
      %p63 = por %p61, %p62
      %p64 = scmp.ne.s32.totalorder %s55, %s56
      %p65 = scmp.eq.s32.totalorder %s29, 0
      %p66 = por %p64, %p65
      %p67 = scmp.ne.s32.totalorder %s55, %s56
      %p68 = scmp.eq.s32.totalorder %s30, 2
      %p69 = por %p67, %p68
      %p71 = scmp.ne.s32.totalorder %s56, %s70
      %p72 = scmp.eq.s32.totalorder %s30, 0
      %p73 = por %p71, %p72
      %s75 = sadd.s32 %s74, 1
      %p78 = scmp.eq.s32.totalorder %s24, 2
      %p79 = scmp.ne.s32.totalorder %s74, %s76
      %p80 = scmp.eq.s32.totalorder %s24, 0
      %p81 = por %p79, %p80
      %p82 = scmp.ne.s32.totalorder %s74, %s76
      %p83 = scmp.eq.s32.totalorder %s29, 2
      %p84 = por %p82, %p83
      %p85 = scmp.ne.s32.totalorder %s76, %s77
      %p86 = scmp.eq.s32.totalorder %s29, 0
      %p87 = por %p85, %p86
      %p88 = scmp.ne.s32.totalorder %s76, %s77
      %p89 = scmp.eq.s32.totalorder %s30, 2
      %p90 = por %p88, %p89
      %p92 = scmp.ne.s32.totalorder %s77, %s91
      %p93 = scmp.eq.s32.totalorder %s30, 0
      %p94 = por %p92, %p93
      %s96 = sadd.s32 %s95, 1
      %p99 = scmp.eq.s32.totalorder %s24, 2
      %p100 = scmp.ne.s32.totalorder %s95, %s97
      %p101 = scmp.eq.s32.totalorder %s24, 0
      %p102 = por %p100, %p101
      %p103 = scmp.ne.s32.totalorder %s95, %s97
      %p104 = scmp.eq.s32.totalorder %s29, 2
      %p105 = por %p103, %p104
      %p106 = scmp.ne.s32.totalorder %s97, %s98
      %p107 = scmp.eq.s32.totalorder %s29, 0
      %p108 = por %p106, %p107
      %p109 = scmp.ne.s32.totalorder %s97, %s98
      %p110 = scmp.eq.s32.totalorder %s30, 2
      %p111 = por %p109, %p110
      %p113 = scmp.ne.s32.totalorder %s98, %s112
      %p114 = scmp.eq.s32.totalorder %s30, 0
      %p115 = por %p113, %p114
      %s117 = sadd.s32 %s116, 1
      %p120 = scmp.eq.s32.totalorder %s24, 2
      %p121 = scmp.ne.s32.totalorder %s116, %s118
      %p122 = scmp.eq.s32.totalorder %s24, 0
      %p123 = por %p121, %p122
      %p124 = scmp.ne.s32.totalorder %s116, %s118
      %p125 = scmp.eq.s32.totalorder %s29, 2
      %p126 = por %p124, %p125
      %p127 = scmp.ne.s32.totalorder %s118, %s119
      %p128 = scmp.eq.s32.totalorder %s29, 0
      %p129 = por %p127, %p128
      %p130 = scmp.ne.s32.totalorder %s118, %s119
      %p131 = scmp.eq.s32.totalorder %s30, 2
      %p132 = por %p130, %p131
      %p134 = scmp.ne.s32.totalorder %s119, %s133
      %p135 = scmp.eq.s32.totalorder %s30, 0
      %p136 = por %p134, %p135
      %s138 = sadd.s32 %s137, 1
      %p141 = scmp.eq.s32.totalorder %s24, 2
      %p142 = scmp.ne.s32.totalorder %s137, %s139
      %p143 = scmp.eq.s32.totalorder %s24, 0
      %p144 = por %p142, %p143
      %p145 = scmp.ne.s32.totalorder %s137, %s139
      %p146 = scmp.eq.s32.totalorder %s29, 2
      %p147 = por %p145, %p146
      %p148 = scmp.ne.s32.totalorder %s139, %s140
      %p149 = scmp.eq.s32.totalorder %s29, 0
      %p150 = por %p148, %p149
      %p151 = scmp.ne.s32.totalorder %s139, %s140
      %p152 = scmp.eq.s32.totalorder %s30, 2
      %p153 = por %p151, %p152
      %p155 = scmp.ne.s32.totalorder %s140, %s154
      %p156 = scmp.eq.s32.totalorder %s30, 0
      %p157 = por %p155, %p156
      %s159 = sadd.s32 %s158, 1
      %p162 = scmp.eq.s32.totalorder %s24, 2
      %p163 = scmp.ne.s32.totalorder %s158, %s160
      %p164 = scmp.eq.s32.totalorder %s24, 0
      %p165 = por %p163, %p164
      %p166 = scmp.ne.s32.totalorder %s158, %s160
      %p167 = scmp.eq.s32.totalorder %s29, 2
      %p168 = por %p166, %p167
      %p169 = scmp.ne.s32.totalorder %s160, %s161
      %p170 = scmp.eq.s32.totalorder %s29, 0
      %p171 = por %p169, %p170
      %p172 = scmp.ne.s32.totalorder %s160, %s161
      %p173 = scmp.eq.s32.totalorder %s30, 2
      %p174 = por %p172, %p173
      %p176 = scmp.ne.s32.totalorder %s161, %s175
      %p177 = scmp.eq.s32.totalorder %s30, 0
      %p178 = por %p176, %p177
      %s179 = ssub.s32 %s24, %s31
      %p180 = scmp.eq.s32.totalorder %s179, 0
      %s182 = sadd.s32 %s181, 1
      %s183 = scalar_select %p180, %s181, %s182
      %p186 = pneg %p180
      %p187 = scmp.eq.s32.totalorder %s24, 2
      %p188 = por %p186, %p187
      %p189 = scmp.ne.s32.totalorder %s181, %s184
      %p190 = scmp.eq.s32.totalorder %s24, 0
      %p191 = por %p189, %p190
      %p192 = scmp.ne.s32.totalorder %s181, %s184
      %p193 = scmp.eq.s32.totalorder %s29, 2
      %p194 = por %p192, %p193
      %p195 = scmp.ne.s32.totalorder %s184, %s185
      %p196 = scmp.eq.s32.totalorder %s29, 0
      %p197 = por %p195, %p196
      %p198 = scmp.ne.s32.totalorder %s184, %s185
      %p199 = scmp.eq.s32.totalorder %s30, 2
      %p200 = por %p198, %p199
      %p202 = scmp.ne.s32.totalorder %s185, %s201
      %p203 = scmp.eq.s32.totalorder %s30, 0
      %p204 = por %p202, %p203
      %s205 = ssub.s32 %s24, %s31
      %p206 = scmp.eq.s32.totalorder %s205, 0
      %s208 = sadd.s32 %s207, 1
      %s209 = scalar_select %p206, %s207, %s208
      %p212 = pneg %p206
      %p213 = scmp.eq.s32.totalorder %s24, 2
      %p214 = por %p212, %p213
      %p215 = scmp.ne.s32.totalorder %s207, %s210
      %p216 = scmp.eq.s32.totalorder %s24, 0
      %p217 = por %p215, %p216
      %p218 = scmp.ne.s32.totalorder %s207, %s210
      %p219 = scmp.eq.s32.totalorder %s29, 2
      %p220 = por %p218, %p219
      %p221 = scmp.ne.s32.totalorder %s210, %s211
      %p222 = scmp.eq.s32.totalorder %s29, 0
      %p223 = por %p221, %p222
      %p224 = scmp.ne.s32.totalorder %s210, %s211
      %p225 = scmp.eq.s32.totalorder %s30, 2
      %p226 = por %p224, %p225
      %p228 = scmp.ne.s32.totalorder %s211, %s227
      %p229 = scmp.eq.s32.totalorder %s30, 0
      %p230 = por %p228, %p229
      %s232 = sadd.s32 %s231, 1
      %p235 = scmp.eq.s32.totalorder %s24, 2
      %p236 = scmp.ne.s32.totalorder %s231, %s233
      %p237 = scmp.eq.s32.totalorder %s24, 0
      %p238 = por %p236, %p237
      %p239 = scmp.ne.s32.totalorder %s231, %s233
      %p240 = scmp.eq.s32.totalorder %s29, 2
      %p241 = por %p239, %p240
      %p242 = scmp.ne.s32.totalorder %s233, %s234
      %p243 = scmp.eq.s32.totalorder %s29, 0
      %p244 = por %p242, %p243
      %p245 = scmp.ne.s32.totalorder %s233, %s234
      %p246 = scmp.eq.s32.totalorder %s30, 2
      %p247 = por %p245, %p246
      %p249 = scmp.ne.s32.totalorder %s234, %s248
      %p250 = scmp.eq.s32.totalorder %s30, 0
      %p251 = por %p249, %p250
      %s253 = sadd.s32 %s252, 1
      %p256 = scmp.eq.s32.totalorder %s24, 2
      %p257 = scmp.ne.s32.totalorder %s252, %s254
      %p258 = scmp.eq.s32.totalorder %s24, 0
      %p259 = por %p257, %p258
      %p260 = scmp.ne.s32.totalorder %s252, %s254
      %p261 = scmp.eq.s32.totalorder %s29, 2
      %p262 = por %p260, %p261
      %p263 = scmp.ne.s32.totalorder %s254, %s255
      %p264 = scmp.eq.s32.totalorder %s29, 0
      %p265 = por %p263, %p264
      %p266 = scmp.ne.s32.totalorder %s254, %s255
      %p267 = scmp.eq.s32.totalorder %s30, 2
      %p268 = por %p266, %p267
      %p270 = scmp.ne.s32.totalorder %s255, %s269
      %p271 = scmp.eq.s32.totalorder %s30, 0
      %p272 = por %p270, %p271
      %s274 = sadd.s32 %s273, 1
      %p277 = scmp.eq.s32.totalorder %s24, 2
      %p278 = scmp.ne.s32.totalorder %s273, %s275
      %p279 = scmp.eq.s32.totalorder %s24, 0
      %p280 = por %p278, %p279
      %p281 = scmp.ne.s32.totalorder %s273, %s275
      %p282 = scmp.eq.s32.totalorder %s29, 2
      %p283 = por %p281, %p282
      %p284 = scmp.ne.s32.totalorder %s275, %s276
      %p285 = scmp.eq.s32.totalorder %s29, 0
      %p286 = por %p284, %p285
      %p287 = scmp.ne.s32.totalorder %s275, %s276
      %p288 = scmp.eq.s32.totalorder %s30, 2
      %p289 = por %p287, %p288
      %p291 = scmp.ne.s32.totalorder %s276, %s290
      %p292 = scmp.eq.s32.totalorder %s30, 0
      %p293 = por %p291, %p292
      %p294 = scmp.le.s32.totalorder 1, %s24
      %p295 = scmp.lt.s32.totalorder %s24, 4
      %p296 = pnand %p294, %p295
      %p297 = pneg %p296
      // Predicated region
      $region9: #{tpu_custom_call.1} parent=5 // pred_check
        _
      $region10: #{tpu_custom_call.1} parent=5 // pred_check_branch
        %299 = sbr.rel (%p296) target = $region12
      $region11: #{tpu_custom_call.1} parent=5 // pred_region
        %s300 = ssub.s32 %s24, 1
        // Predicated region
        $region13: #{tpu_custom_call.1} parent=11 // pred_check
          %p301 = pneg %p45
        $region14: #{tpu_custom_call.1} parent=11 // pred_check_branch
          %303 = sbr.rel (%p301) target = $region16
        $region15: #{tpu_custom_call.1} parent=11 // pred_region
          %s305 = ssub.s32 128, 128
          %306 = vsyncadd [#allocation8], %s305
          %s308 = sshll.u32 [#allocation7], 4
          %s309 = int_to_ptr.vmem [resolvable:$true] %s308
          %311 = dma.hbm_to_vmem [thread:$0]  %s0, 128, %s309, [#allocation8]
        $region16: #{tpu_custom_call.1} parent=11 // pred_fallthru
          _
        // Predicated region
        $region17: #{tpu_custom_call.1} parent=11 // pred_check
          %p312 = pneg %p66
        $region18: #{tpu_custom_call.1} parent=11 // pred_check_branch
          %314 = sbr.rel (%p312) target = $region20
        $region19: #{tpu_custom_call.1} parent=11 // pred_region
          %s316 = ssub.s32 256, 256
          %317 = vsyncadd [#allocation11], %s316
          %s318 = sshll.u32 [#allocation10], 4
          %s319 = int_to_ptr.vmem [resolvable:$true] %s318
          %324 = dma.hbm_to_vmem [thread:$0]  %s1, 256, %s319, [#allocation11], 128, 128, 8
        $region20: #{tpu_custom_call.1} parent=11 // pred_fallthru
          _
        // Predicated region
        $region21: #{tpu_custom_call.1} parent=11 // pred_check
          %p325 = pneg %p87
        $region22: #{tpu_custom_call.1} parent=11 // pred_check_branch
          %327 = sbr.rel (%p325) target = $region24
        $region23: #{tpu_custom_call.1} parent=11 // pred_region
          %s329 = ssub.s32 256, 256
          %330 = vsyncadd [#allocation11], %s329
          %s331 = sshll.u32 [#allocation12], 4
          %s332 = int_to_ptr.vmem [resolvable:$true] %s331
          %337 = dma.hbm_to_vmem [thread:$0]  %s2, 256, %s332, [#allocation11], 128, 128, 8
        $region24: #{tpu_custom_call.1} parent=11 // pred_fallthru
          _
        // Predicated region
        $region25: #{tpu_custom_call.1} parent=11 // pred_check
          %p338 = pneg %p108
        $region26: #{tpu_custom_call.1} parent=11 // pred_check_branch
          %340 = sbr.rel (%p338) target = $region28
        $region27: #{tpu_custom_call.1} parent=11 // pred_region
          %s342 = ssub.s32 512, 512
          %343 = vsyncadd [#allocation14], %s342
          %s344 = sshll.u32 [#allocation13], 4
          %s345 = int_to_ptr.vmem [resolvable:$true] %s344
          %350 = dma.hbm_to_vmem [thread:$0]  %s3, 512, %s345, [#allocation14], 64, 64, 4
        $region28: #{tpu_custom_call.1} parent=11 // pred_fallthru
          _
        // Predicated region
        $region29: #{tpu_custom_call.1} parent=11 // pred_check
          %p351 = pneg %p129
        $region30: #{tpu_custom_call.1} parent=11 // pred_check_branch
          %353 = sbr.rel (%p351) target = $region32
        $region31: #{tpu_custom_call.1} parent=11 // pred_region
          %s355 = ssub.s32 16384, 16384
          %356 = vsyncadd [#allocation14], %s355
          %s357 = sshll.u32 [#allocation15], 4
          %s358 = int_to_ptr.vmem [resolvable:$true] %s357
          %363 = dma.hbm_to_vmem [thread:$0]  %s4, 16384, %s358, [#allocation14], 256, 256, 16
        $region32: #{tpu_custom_call.1} parent=11 // pred_fallthru
          _
        // Predicated region
        $region33: #{tpu_custom_call.1} parent=11 // pred_check
          %p364 = pneg %p150
        $region34: #{tpu_custom_call.1} parent=11 // pred_check_branch
          %366 = sbr.rel (%p364) target = $region36
        $region35: #{tpu_custom_call.1} parent=11 // pred_region
          _
        $region36: #{tpu_custom_call.1} parent=11 // pred_fallthru
          _
        // Predicated region
        $region37: #{tpu_custom_call.1} parent=11 // pred_check
          %p367 = pneg %p171
        $region38: #{tpu_custom_call.1} parent=11 // pred_check_branch
          %369 = sbr.rel (%p367) target = $region40
        $region39: #{tpu_custom_call.1} parent=11 // pred_region
          %s371 = ssub.s32 2048, 2048
          %372 = vsyncadd [#allocation17], %s371
          %s373 = sshll.u32 [#allocation16], 4
          %s374 = int_to_ptr.vmem [resolvable:$true] %s373
          %379 = dma.hbm_to_vmem [thread:$0]  %s6, 2048, %s374, [#allocation17], 64, 64, 4
        $region40: #{tpu_custom_call.1} parent=11 // pred_fallthru
          _
      $region12: #{tpu_custom_call.1} parent=5 // pred_fallthru
        _
      %p380 = scmp.lt.s32.totalorder %s24, 3
      // Predicated region
      $region41: #{tpu_custom_call.1} parent=5 // pred_check
        %p381 = pneg %p380
      $region42: #{tpu_custom_call.1} parent=5 // pred_check_branch
        %383 = sbr.rel (%p381) target = $region44
      $region43: #{tpu_custom_call.1} parent=5 // pred_region
        // Predicated region
        $region45: #{tpu_custom_call.1} parent=43 // pred_check
          %p384 = pneg %p191
        $region46: #{tpu_custom_call.1} parent=43 // pred_check_branch
          %386 = sbr.rel (%p384) target = $region48
        $region47: #{tpu_custom_call.1} parent=43 // pred_region
          %s387 = sand.u32 %s24, 1
          %s388 = scalar_lea.sflag [#allocation8], %s387
          %s389 = sand.u32 %s181, 1
          %s390 = smul.addr %s389, 64
          %s391 = scalar_lea.vmem [#allocation18], %s390
          %s393 = ssub.s32 1024, 1024
          %394 = vsyncadd %s388, %s393
          %s395 = smul.addr %s24, 64
          %s396 = scalar_lea.hbm %s7, %s395
          %s397 = sshll.u32 %s391, 4
          %s398 = int_to_ptr.vmem [resolvable:$true] %s397
          %403 = dma.hbm_to_vmem [thread:$0]  %s396, 1024, %s398, %s388, 192, 64, 4
        $region48: #{tpu_custom_call.1} parent=43 // pred_fallthru
          _
        // Predicated region
        $region49: #{tpu_custom_call.1} parent=43 // pred_check
          %p404 = pneg %p217
        $region50: #{tpu_custom_call.1} parent=43 // pred_check_branch
          %406 = sbr.rel (%p404) target = $region52
        $region51: #{tpu_custom_call.1} parent=43 // pred_region
          %p407 = scmp.lt.s32.totalorder %s24, 2
          %s408 = scalar_select %p407, %s24, 2
          %s409 = scalar_lea.vmem %s8, %s408
        $region52: #{tpu_custom_call.1} parent=43 // pred_fallthru
          _
      $region44: #{tpu_custom_call.1} parent=5 // pred_fallthru
        _
      %p410 = scmp.le.s32.totalorder 1, %s24
      %p411 = scmp.lt.s32.totalorder %s24, 4
      %p412 = pnand %p410, %p411
      %p413 = pneg %p412
      // Predicated region
      $region53: #{tpu_custom_call.1} parent=5 // pred_check
        _
      $region54: #{tpu_custom_call.1} parent=5 // pred_check_branch
        %415 = sbr.rel (%p412) target = $region56
      $region55: #{tpu_custom_call.1} parent=5 // pred_region
        %s416 = ssub.s32 %s24, 1
        // Predicated region
        $region57: #{tpu_custom_call.1} parent=55 // pred_check
          %p417 = pneg %p45
        $region58: #{tpu_custom_call.1} parent=55 // pred_check_branch
          %419 = sbr.rel (%p417) target = $region60
        $region59: #{tpu_custom_call.1} parent=55 // pred_region
          %420 = dma.done [#allocation8], 128
        $region60: #{tpu_custom_call.1} parent=55 // pred_fallthru
          _
        // Predicated region
        $region61: #{tpu_custom_call.1} parent=55 // pred_check
          %p421 = pneg %p66
        $region62: #{tpu_custom_call.1} parent=55 // pred_check_branch
          %423 = sbr.rel (%p421) target = $region64
        $region63: #{tpu_custom_call.1} parent=55 // pred_region
          %424 = dma.done [#allocation11], 256
        $region64: #{tpu_custom_call.1} parent=55 // pred_fallthru
          _
        // Predicated region
        $region65: #{tpu_custom_call.1} parent=55 // pred_check
          %p425 = pneg %p87
        $region66: #{tpu_custom_call.1} parent=55 // pred_check_branch
          %427 = sbr.rel (%p425) target = $region68
        $region67: #{tpu_custom_call.1} parent=55 // pred_region
          %428 = dma.done [#allocation11], 256
        $region68: #{tpu_custom_call.1} parent=55 // pred_fallthru
          _
        // Predicated region
        $region69: #{tpu_custom_call.1} parent=55 // pred_check
          %p429 = pneg %p108
        $region70: #{tpu_custom_call.1} parent=55 // pred_check_branch
          %431 = sbr.rel (%p429) target = $region72
        $region71: #{tpu_custom_call.1} parent=55 // pred_region
          %432 = dma.done [#allocation14], 512
        $region72: #{tpu_custom_call.1} parent=55 // pred_fallthru
          _
        // Predicated region
        $region73: #{tpu_custom_call.1} parent=55 // pred_check
          %p433 = pneg %p129
        $region74: #{tpu_custom_call.1} parent=55 // pred_check_branch
          %435 = sbr.rel (%p433) target = $region76
        $region75: #{tpu_custom_call.1} parent=55 // pred_region
          %436 = dma.done [#allocation14], 16384
        $region76: #{tpu_custom_call.1} parent=55 // pred_fallthru
          _
        // Predicated region
        $region77: #{tpu_custom_call.1} parent=55 // pred_check
          %p437 = pneg %p171
        $region78: #{tpu_custom_call.1} parent=55 // pred_check_branch
          %439 = sbr.rel (%p437) target = $region80
        $region79: #{tpu_custom_call.1} parent=55 // pred_region
          %440 = dma.done [#allocation17], 2048
        $region80: #{tpu_custom_call.1} parent=55 // pred_fallthru
          _
        %s441 = sand.u32 %s29, 1
        %s442 = scalar_lea.sflag [#allocation8], %s441
        %s443 = sand.u32 %s184, 1
        %s444 = smul.addr %s443, 64
        %s445 = scalar_lea.vmem [#allocation18], %s444
        // Predicated region
        $region81: #{tpu_custom_call.1} parent=55 // pred_check
          %p446 = pneg %p197
        $region82: #{tpu_custom_call.1} parent=55 // pred_check_branch
          %448 = sbr.rel (%p446) target = $region84
        $region83: #{tpu_custom_call.1} parent=55 // pred_region
          %449 = dma.done %s442, 1024
        $region84: #{tpu_custom_call.1} parent=55 // pred_fallthru
          _
        %p450 = pneg %p45
        %p451 = pneg %p42
        %p452 = pneg %p66
        %p453 = pneg %p63
        %p454 = pneg %p87
        %p455 = pneg %p84
        %p456 = pneg %p108
        %p457 = pneg %p105
        %p458 = pneg %p129
        %p459 = pneg %p126
        %p460 = pneg %p150
        %p461 = pneg %p147
        %p462 = pneg %p171
        %p463 = pneg %p168
        %s464 = sand.u32 %s29, 1
        %s465 = scalar_lea.sflag [#allocation8], %s464
        %s466 = sand.u32 %s184, 1
        %s467 = smul.addr %s466, 64
        %s468 = scalar_lea.vmem [#allocation18], %s467
        %p469 = pneg %p197
        %p470 = pneg %p194
        %p471 = scmp.lt.s32.totalorder %s29, 2
        %s472 = scalar_select %p471, %s29, 2
        %s473 = scalar_lea.vmem %s8, %s472
        %p474 = pneg %p223
        %p475 = pneg %p220
        %p476 = pneg %p244
        %p477 = pneg %p241
        %p478 = pneg %p265
        %p479 = pneg %p262
        %p480 = pneg %p286
        %p481 = pneg %p283
        %p482 = scmp.lt.s32.totalorder %s29, 2
        %s483 = scalar_select %p482, %s29, 2
        %s484 = scalar_lea.vmem %s8, %s483
        %p486 = scmp.eq.s32.totalorder %s29, 0
        // Predicated region
        $region85: #{tpu_custom_call.1} parent=55 // pred_check
          %p487 = pneg %p486
        $region86: #{tpu_custom_call.1} parent=55 // pred_check_branch
          %489 = sbr.rel (%p487) target = $region88
        $region87: #{tpu_custom_call.1} parent=55 // pred_region
          %v490 = vld [vmem:[#allocation7] sm:$0xff]
          %v491 = vld [vmem:[#allocation10] sm:$0xff]
          %v492 = vld [vmem:[#allocation12] sm:$0xff]
          %493 = vst [vmem:[#allocation2] sm:$0xff] %v490
          %494 = vst [vmem:[#allocation2 + $0x8] sm:$0xff] %v491
          %v495 = vld [vmem:[#allocation2] sm:$0xff]
          %v496 = vld [vmem:[#allocation2 + $0x8] sm:$0xff]
          %v497 = vpack.c.bf16 %v495, %v495
          %v498 = vpack.c.bf16 %v496, %v496
          %v499 = vld [vmem:[#allocation15] sm:$0xff]
          %v500 = vld [vmem:[#allocation15 + $0x8] sm:$0xff]
          %v501 = vld [vmem:[#allocation15 + $0x10] sm:$0xff]
          %v502 = vld [vmem:[#allocation15 + $0x18] sm:$0xff]
          %v503 = vld [vmem:[#allocation15 + $0x20] sm:$0xff]
          %v504 = vld [vmem:[#allocation15 + $0x28] sm:$0xff]
          %v505 = vld [vmem:[#allocation15 + $0x30] sm:$0xff]
          %v506 = vld [vmem:[#allocation15 + $0x38] sm:$0xff]
          %v507 = vld [vmem:[#allocation15 + $0x40] sm:$0xff]
          %v508 = vld [vmem:[#allocation15 + $0x48] sm:$0xff]
          %v509 = vld [vmem:[#allocation15 + $0x50] sm:$0xff]
          %v510 = vld [vmem:[#allocation15 + $0x58] sm:$0xff]
          %v511 = vld [vmem:[#allocation15 + $0x60] sm:$0xff]
          %v512 = vld [vmem:[#allocation15 + $0x68] sm:$0xff]
          %v513 = vld [vmem:[#allocation15 + $0x70] sm:$0xff]
          %v514 = vld [vmem:[#allocation15 + $0x78] sm:$0xff]
          %v515 = vld [vmem:[#allocation15 + $0x80] sm:$0xff]
          %v516 = vld [vmem:[#allocation15 + $0x88] sm:$0xff]
          %v517 = vld [vmem:[#allocation15 + $0x90] sm:$0xff]
          %v518 = vld [vmem:[#allocation15 + $0x98] sm:$0xff]
          %v519 = vld [vmem:[#allocation15 + $0xa0] sm:$0xff]
          %v520 = vld [vmem:[#allocation15 + $0xa8] sm:$0xff]
          %v521 = vld [vmem:[#allocation15 + $0xb0] sm:$0xff]
          %v522 = vld [vmem:[#allocation15 + $0xb8] sm:$0xff]
          %v523 = vld [vmem:[#allocation15 + $0xc0] sm:$0xff]
          %v524 = vld [vmem:[#allocation15 + $0xc8] sm:$0xff]
          %v525 = vld [vmem:[#allocation15 + $0xd0] sm:$0xff]
          %v526 = vld [vmem:[#allocation15 + $0xd8] sm:$0xff]
          %v527 = vld [vmem:[#allocation15 + $0xe0] sm:$0xff]
          %v528 = vld [vmem:[#allocation15 + $0xe8] sm:$0xff]
          %v529 = vld [vmem:[#allocation15 + $0xf0] sm:$0xff]
          %v530 = vld [vmem:[#allocation15 + $0xf8] sm:$0xff]
          %v531 = vld [vmem:[#allocation15 + $0x100] sm:$0xff]
          %v532 = vld [vmem:[#allocation15 + $0x108] sm:$0xff]
          %v533 = vld [vmem:[#allocation15 + $0x110] sm:$0xff]
          %v534 = vld [vmem:[#allocation15 + $0x118] sm:$0xff]
          %v535 = vld [vmem:[#allocation15 + $0x120] sm:$0xff]
          %v536 = vld [vmem:[#allocation15 + $0x128] sm:$0xff]
          %v537 = vld [vmem:[#allocation15 + $0x130] sm:$0xff]
          %v538 = vld [vmem:[#allocation15 + $0x138] sm:$0xff]
          %v539 = vld [vmem:[#allocation15 + $0x140] sm:$0xff]
          %v540 = vld [vmem:[#allocation15 + $0x148] sm:$0xff]
          %v541 = vld [vmem:[#allocation15 + $0x150] sm:$0xff]
          %v542 = vld [vmem:[#allocation15 + $0x158] sm:$0xff]
          %v543 = vld [vmem:[#allocation15 + $0x160] sm:$0xff]
          %v544 = vld [vmem:[#allocation15 + $0x168] sm:$0xff]
          %v545 = vld [vmem:[#allocation15 + $0x170] sm:$0xff]
          %v546 = vld [vmem:[#allocation15 + $0x178] sm:$0xff]
          %v547 = vld [vmem:[#allocation15 + $0x180] sm:$0xff]
          %v548 = vld [vmem:[#allocation15 + $0x188] sm:$0xff]
          %v549 = vld [vmem:[#allocation15 + $0x190] sm:$0xff]
          %v550 = vld [vmem:[#allocation15 + $0x198] sm:$0xff]
          %v551 = vld [vmem:[#allocation15 + $0x1a0] sm:$0xff]
          %v552 = vld [vmem:[#allocation15 + $0x1a8] sm:$0xff]
          %v553 = vld [vmem:[#allocation15 + $0x1b0] sm:$0xff]
          %v554 = vld [vmem:[#allocation15 + $0x1b8] sm:$0xff]
          %v555 = vld [vmem:[#allocation15 + $0x1c0] sm:$0xff]
          %v556 = vld [vmem:[#allocation15 + $0x1c8] sm:$0xff]
          %v557 = vld [vmem:[#allocation15 + $0x1d0] sm:$0xff]
          %v558 = vld [vmem:[#allocation15 + $0x1d8] sm:$0xff]
          %v559 = vld [vmem:[#allocation15 + $0x1e0] sm:$0xff]
          %v560 = vld [vmem:[#allocation15 + $0x1e8] sm:$0xff]
          %v561 = vld [vmem:[#allocation15 + $0x1f0] sm:$0xff]
          %v562 = vld [vmem:[#allocation15 + $0x1f8] sm:$0xff]
          %v563 = vld [vmem:[%s5] sm:$0xf]
          %v565 = vlaneseq
          %v566 = vshrl.u32 %v565, 7
          %v567 = vsub.s32 0, %v566
          %v568 = vrot.slane %v563, %v567
          %v569 = vlaneseq
          %v570 = vshrl.u32 %v569, 7
          %v571 = vsub.s32 1, %v570
          %v572 = vrot.slane %v563, %v571
          %v573 = vlaneseq
          %v574 = vshrl.u32 %v573, 7
          %v575 = vsub.s32 2, %v574
          %v576 = vrot.slane %v563, %v575
          %v577 = vlaneseq
          %v578 = vshrl.u32 %v577, 7
          %v579 = vsub.s32 3, %v578
          %v580 = vrot.slane %v563, %v579
          %v649 = vunpack.c.l.b16 %v499
          %v650 = vunpack.c.h.b16 %v499
          %v651 = vunpack.c.l.b16 %v500
          %v652 = vunpack.c.h.b16 %v500
          %v653 = vunpack.c.l.b16 %v501
          %v654 = vunpack.c.h.b16 %v501
          %v655 = vunpack.c.l.b16 %v502
          %v656 = vunpack.c.h.b16 %v502
          %v657 = vunpack.c.l.b16 %v503
          %v658 = vunpack.c.h.b16 %v503
          %v659 = vunpack.c.l.b16 %v504
          %v660 = vunpack.c.h.b16 %v504
          %v661 = vunpack.c.l.b16 %v505
          %v662 = vunpack.c.h.b16 %v505
          %v663 = vunpack.c.l.b16 %v506
          %v664 = vunpack.c.h.b16 %v506
          %v665 = vunpack.c.l.b16 %v507
          %v666 = vunpack.c.h.b16 %v507
          %v667 = vunpack.c.l.b16 %v508
          %v668 = vunpack.c.h.b16 %v508
          %v669 = vunpack.c.l.b16 %v509
          %v670 = vunpack.c.h.b16 %v509
          %v671 = vunpack.c.l.b16 %v510
          %v672 = vunpack.c.h.b16 %v510
          %v673 = vunpack.c.l.b16 %v511
          %v674 = vunpack.c.h.b16 %v511
          %v675 = vunpack.c.l.b16 %v512
          %v676 = vunpack.c.h.b16 %v512
          %v677 = vunpack.c.l.b16 %v513
          %v678 = vunpack.c.h.b16 %v513
          %v679 = vunpack.c.l.b16 %v514
          %v680 = vunpack.c.h.b16 %v514
          %v681 = vunpack.c.l.b16 %v515
          %v682 = vunpack.c.h.b16 %v515
          %v683 = vunpack.c.l.b16 %v516
          %v684 = vunpack.c.h.b16 %v516
          %v685 = vunpack.c.l.b16 %v517
          %v686 = vunpack.c.h.b16 %v517
          %v687 = vunpack.c.l.b16 %v518
          %v688 = vunpack.c.h.b16 %v518
          %v689 = vunpack.c.l.b16 %v519
          %v690 = vunpack.c.h.b16 %v519
          %v691 = vunpack.c.l.b16 %v520
          %v692 = vunpack.c.h.b16 %v520
          %v693 = vunpack.c.l.b16 %v521
          %v694 = vunpack.c.h.b16 %v521
          %v695 = vunpack.c.l.b16 %v522
          %v696 = vunpack.c.h.b16 %v522
          %v697 = vunpack.c.l.b16 %v523
          %v698 = vunpack.c.h.b16 %v523
          %v699 = vunpack.c.l.b16 %v524
          %v700 = vunpack.c.h.b16 %v524
          %v701 = vunpack.c.l.b16 %v525
          %v702 = vunpack.c.h.b16 %v525
          %v703 = vunpack.c.l.b16 %v526
          %v704 = vunpack.c.h.b16 %v526
          %v705 = vunpack.c.l.b16 %v527
          %v706 = vunpack.c.h.b16 %v527
          %v707 = vunpack.c.l.b16 %v528
          %v708 = vunpack.c.h.b16 %v528
          %v709 = vunpack.c.l.b16 %v529
          %v710 = vunpack.c.h.b16 %v529
          %v711 = vunpack.c.l.b16 %v530
          %v712 = vunpack.c.h.b16 %v530
          %v713 = vunpack.c.l.b16 %v531
          %v714 = vunpack.c.h.b16 %v531
          %v715 = vunpack.c.l.b16 %v532
          %v716 = vunpack.c.h.b16 %v532
          %v717 = vunpack.c.l.b16 %v533
          %v718 = vunpack.c.h.b16 %v533
          %v719 = vunpack.c.l.b16 %v534
          %v720 = vunpack.c.h.b16 %v534
          %v721 = vunpack.c.l.b16 %v535
          %v722 = vunpack.c.h.b16 %v535
          %v723 = vunpack.c.l.b16 %v536
          %v724 = vunpack.c.h.b16 %v536
          %v725 = vunpack.c.l.b16 %v537
          %v726 = vunpack.c.h.b16 %v537
          %v727 = vunpack.c.l.b16 %v538
          %v728 = vunpack.c.h.b16 %v538
          %v729 = vunpack.c.l.b16 %v539
          %v730 = vunpack.c.h.b16 %v539
          %v731 = vunpack.c.l.b16 %v540
          %v732 = vunpack.c.h.b16 %v540
          %v733 = vunpack.c.l.b16 %v541
          %v734 = vunpack.c.h.b16 %v541
          %v735 = vunpack.c.l.b16 %v542
          %v736 = vunpack.c.h.b16 %v542
          %v737 = vunpack.c.l.b16 %v543
          %v738 = vunpack.c.h.b16 %v543
          %v739 = vunpack.c.l.b16 %v544
          %v740 = vunpack.c.h.b16 %v544
          %v741 = vunpack.c.l.b16 %v545
          %v742 = vunpack.c.h.b16 %v545
          %v743 = vunpack.c.l.b16 %v546
          %v744 = vunpack.c.h.b16 %v546
          %v745 = vunpack.c.l.b16 %v547
          %v746 = vunpack.c.h.b16 %v547
          %v747 = vunpack.c.l.b16 %v548
          %v748 = vunpack.c.h.b16 %v548
          %v749 = vunpack.c.l.b16 %v549
          %v750 = vunpack.c.h.b16 %v549
          %v751 = vunpack.c.l.b16 %v550
          %v752 = vunpack.c.h.b16 %v550
          %v753 = vunpack.c.l.b16 %v551
          %v754 = vunpack.c.h.b16 %v551
          %v755 = vunpack.c.l.b16 %v552
          %v756 = vunpack.c.h.b16 %v552
          %v757 = vunpack.c.l.b16 %v553
          %v758 = vunpack.c.h.b16 %v553
          %v759 = vunpack.c.l.b16 %v554
          %v760 = vunpack.c.h.b16 %v554
          %v761 = vunpack.c.l.b16 %v555
          %v762 = vunpack.c.h.b16 %v555
          %v763 = vunpack.c.l.b16 %v556
          %v764 = vunpack.c.h.b16 %v556
          %v765 = vunpack.c.l.b16 %v557
          %v766 = vunpack.c.h.b16 %v557
          %v767 = vunpack.c.l.b16 %v558
          %v768 = vunpack.c.h.b16 %v558
          %v769 = vunpack.c.l.b16 %v559
          %v770 = vunpack.c.h.b16 %v559
          %v771 = vunpack.c.l.b16 %v560
          %v772 = vunpack.c.h.b16 %v560
          %v773 = vunpack.c.l.b16 %v561
          %v774 = vunpack.c.h.b16 %v561
          %v775 = vunpack.c.l.b16 %v562
          %v776 = vunpack.c.h.b16 %v562
          %v777 = vpack.c.b16 %v653, %v649
          %v778 = vpack.c.b16 %v654, %v650
          %v779 = vpack.c.b16 %v655, %v651
          %v780 = vpack.c.b16 %v656, %v652
          %v781 = vpack.c.b16 %v661, %v657
          %v782 = vpack.c.b16 %v662, %v658
          %v783 = vpack.c.b16 %v663, %v659
          %v784 = vpack.c.b16 %v664, %v660
          %v785 = vpack.c.b16 %v669, %v665
          %v786 = vpack.c.b16 %v670, %v666
          %v787 = vpack.c.b16 %v671, %v667
          %v788 = vpack.c.b16 %v672, %v668
          %v789 = vpack.c.b16 %v677, %v673
          %v790 = vpack.c.b16 %v678, %v674
          %v791 = vpack.c.b16 %v679, %v675
          %v792 = vpack.c.b16 %v680, %v676
          %v793 = vpack.c.b16 %v685, %v681
          %v794 = vpack.c.b16 %v686, %v682
          %v795 = vpack.c.b16 %v687, %v683
          %v796 = vpack.c.b16 %v688, %v684
          %v797 = vpack.c.b16 %v693, %v689
          %v798 = vpack.c.b16 %v694, %v690
          %v799 = vpack.c.b16 %v695, %v691
          %v800 = vpack.c.b16 %v696, %v692
          %v801 = vpack.c.b16 %v701, %v697
          %v802 = vpack.c.b16 %v702, %v698
          %v803 = vpack.c.b16 %v703, %v699
          %v804 = vpack.c.b16 %v704, %v700
          %v805 = vpack.c.b16 %v709, %v705
          %v806 = vpack.c.b16 %v710, %v706
          %v807 = vpack.c.b16 %v711, %v707
          %v808 = vpack.c.b16 %v712, %v708
          %v809 = vpack.c.b16 %v717, %v713
          %v810 = vpack.c.b16 %v718, %v714
          %v811 = vpack.c.b16 %v719, %v715
          %v812 = vpack.c.b16 %v720, %v716
          %v813 = vpack.c.b16 %v725, %v721
          %v814 = vpack.c.b16 %v726, %v722
          %v815 = vpack.c.b16 %v727, %v723
          %v816 = vpack.c.b16 %v728, %v724
          %v817 = vpack.c.b16 %v733, %v729
          %v818 = vpack.c.b16 %v734, %v730
          %v819 = vpack.c.b16 %v735, %v731
          %v820 = vpack.c.b16 %v736, %v732
          %v821 = vpack.c.b16 %v741, %v737
          %v822 = vpack.c.b16 %v742, %v738
          %v823 = vpack.c.b16 %v743, %v739
          %v824 = vpack.c.b16 %v744, %v740
          %v825 = vpack.c.b16 %v749, %v745
          %v826 = vpack.c.b16 %v750, %v746
          %v827 = vpack.c.b16 %v751, %v747
          %v828 = vpack.c.b16 %v752, %v748
          %v829 = vpack.c.b16 %v757, %v753
          %v830 = vpack.c.b16 %v758, %v754
          %v831 = vpack.c.b16 %v759, %v755
          %v832 = vpack.c.b16 %v760, %v756
          %v833 = vpack.c.b16 %v765, %v761
          %v834 = vpack.c.b16 %v766, %v762
          %v835 = vpack.c.b16 %v767, %v763
          %v836 = vpack.c.b16 %v768, %v764
          %v837 = vpack.c.b16 %v773, %v769
          %v838 = vpack.c.b16 %v774, %v770
          %v839 = vpack.c.b16 %v775, %v771
          %v840 = vpack.c.b16 %v776, %v772
          %905 = vmatprep.subr.bf16.mxu0 %v778
          %906 = vmatpush1.bf16.msra.mxu0 %v777
          %907 = vmatprep.subr.bf16.mxu0 %v782
          %908 = vmatpush1.bf16.msra.mxu0 %v781
          %909 = vmatprep.subr.bf16.mxu0 %v786
          %910 = vmatpush1.bf16.msra.mxu0 %v785
          %911 = vmatprep.subr.bf16.mxu0 %v790
          %912 = vmatpush1.bf16.msra.mxu0 %v789
          %913 = vmatprep.subr.bf16.mxu0 %v794
          %914 = vmatpush1.bf16.msra.mxu0 %v793
          %915 = vmatprep.subr.bf16.mxu0 %v798
          %916 = vmatpush1.bf16.msra.mxu0 %v797
          %917 = vmatprep.subr.bf16.mxu0 %v802
          %918 = vmatpush1.bf16.msra.mxu0 %v801
          %919 = vmatprep.subr.bf16.mxu0 %v806
          %920 = vmatpush1.bf16.msra.mxu0 %v805
          %921 = vmatprep.subr.bf16.mxu0 %v810
          %922 = vmatpush1.bf16.msra.mxu0 %v809
          %923 = vmatprep.subr.bf16.mxu0 %v814
          %924 = vmatpush1.bf16.msra.mxu0 %v813
          %925 = vmatprep.subr.bf16.mxu0 %v818
          %926 = vmatpush1.bf16.msra.mxu0 %v817
          %927 = vmatprep.subr.bf16.mxu0 %v822
          %928 = vmatpush1.bf16.msra.mxu0 %v821
          %929 = vmatprep.subr.bf16.mxu0 %v826
          %930 = vmatpush1.bf16.msra.mxu0 %v825
          %931 = vmatprep.subr.bf16.mxu0 %v830
          %932 = vmatpush1.bf16.msra.mxu0 %v829
          %933 = vmatprep.subr.bf16.mxu0 %v834
          %934 = vmatpush1.bf16.msra.mxu0 %v833
          %935 = vmatprep.subr.bf16.mxu0 %v838
          %936 = vmatpush1.bf16.msra.mxu0 %v837
          %937 = vmatprep.mubr.bf16.mxu0 %v498
          %938 = vmatmul.mubr.bf16.gmra.mrb[0].mxu0 %v497
          %v939 = vpop.f32.mrb[0].mxu0
          %v940 = vadd.f32 %v568, %v939
          %v941 = vpop.f32.mrb[0].mxu0
          %v942 = vadd.f32 %v572, %v941
          %v943 = vpop.f32.mrb[0].mxu0
          %v944 = vpop.f32.mrb[0].mxu0
          %945 = vdwg.mxu0
          %946 = vmatprep.subr.bf16.mxu0 %v780
          %947 = vmatpush1.bf16.msra.mxu0 %v779
          %948 = vmatprep.subr.bf16.mxu0 %v784
          %949 = vmatpush1.bf16.msra.mxu0 %v783
          %950 = vmatprep.subr.bf16.mxu0 %v788
          %951 = vmatpush1.bf16.msra.mxu0 %v787
          %952 = vmatprep.subr.bf16.mxu0 %v792
          %953 = vmatpush1.bf16.msra.mxu0 %v791
          %954 = vmatprep.subr.bf16.mxu0 %v796
          %955 = vmatpush1.bf16.msra.mxu0 %v795
          %956 = vmatprep.subr.bf16.mxu0 %v800
          %957 = vmatpush1.bf16.msra.mxu0 %v799
          %958 = vmatprep.subr.bf16.mxu0 %v804
          %959 = vmatpush1.bf16.msra.mxu0 %v803
          %960 = vmatprep.subr.bf16.mxu0 %v808
          %961 = vmatpush1.bf16.msra.mxu0 %v807
          %962 = vmatprep.subr.bf16.mxu0 %v812
          %963 = vmatpush1.bf16.msra.mxu0 %v811
          %964 = vmatprep.subr.bf16.mxu0 %v816
          %965 = vmatpush1.bf16.msra.mxu0 %v815
          %966 = vmatprep.subr.bf16.mxu0 %v820
          %967 = vmatpush1.bf16.msra.mxu0 %v819
          %968 = vmatprep.subr.bf16.mxu0 %v824
          %969 = vmatpush1.bf16.msra.mxu0 %v823
          %970 = vmatprep.subr.bf16.mxu0 %v828
          %971 = vmatpush1.bf16.msra.mxu0 %v827
          %972 = vmatprep.subr.bf16.mxu0 %v832
          %973 = vmatpush1.bf16.msra.mxu0 %v831
          %974 = vmatprep.subr.bf16.mxu0 %v836
          %975 = vmatpush1.bf16.msra.mxu0 %v835
          %976 = vmatprep.subr.bf16.mxu0 %v840
          %977 = vmatpush1.bf16.msra.mxu0 %v839
          %978 = vmatprep.mubr.bf16.mxu0 %v498
          %979 = vmatmul.mubr.bf16.gmra.mrb[0].mxu0 %v497
          %v980 = vpop.f32.mrb[0].mxu0
          %v981 = vadd.f32 %v576, %v980
          %v982 = vpop.f32.mrb[0].mxu0
          %v983 = vadd.f32 %v580, %v982
          %v984 = vpop.f32.mrb[0].mxu0
          %v985 = vpop.f32.mrb[0].mxu0
          %986 = vdwg.mxu0
          %v987 = vmul.f32 %v940, 0.5
          %v988 = vtanh.pop %v987
          %v989 = vmul.f32 %v988, 0.5
          %v990 = vadd.f32 %v989, 0.5
          %v991 = vmul.f32 %v942, 0.5
          %v992 = vtanh.pop %v991
          %v993 = vmul.f32 %v992, 0.5
          %v994 = vadd.f32 %v993, 0.5
          %v995 = vtanh.pop %v981
          %v996 = vmul.f32 %v983, 0.5
          %v997 = vtanh.pop %v996
          %v998 = vmul.f32 %v997, 0.5
          %v999 = vadd.f32 %v998, 0.5
          %v1000 = vmul.f32 %v994, %v492
          %v1001 = vmul.f32 %v990, %v995
          %v1002 = vadd.f32 %v1000, %v1001
          %v1003 = vtanh.pop %v1002
          %v1004 = vmul.f32 %v999, %v1003
          %1005 = vst [vmem:[#allocation20] sm:$0xff] %v1004
          %1006 = vst [vmem:[#allocation22] sm:$0xff] %v1002
          %s1007 = scalar_lea.vmem [#allocation10], 8
          %v1008 = vld [vmem:[%s1007] sm:$0xff]
          %s1009 = scalar_lea.vmem [#allocation12], 8
          %v1010 = vld [vmem:[%s1009] sm:$0xff]
          %1011 = vst [vmem:[#allocation2] sm:$0xff] %v1004
          %1012 = vst [vmem:[#allocation2 + $0x8] sm:$0xff] %v1008
          %v1013 = vld [vmem:[#allocation2] sm:$0xff]
          %v1014 = vld [vmem:[#allocation2 + $0x8] sm:$0xff]
          %v1015 = vpack.c.bf16 %v1013, %v1013
          %v1016 = vpack.c.bf16 %v1014, %v1014
          %s1017 = scalar_lea.vmem [#allocation15], 512
          %v1018 = vld [vmem:[%s1017] sm:$0xff]
          %v1019 = vld [vmem:[%s1017 + $0x8] sm:$0xff]
          %v1020 = vld [vmem:[%s1017 + $0x10] sm:$0xff]
          %v1021 = vld [vmem:[%s1017 + $0x18] sm:$0xff]
          %v1022 = vld [vmem:[%s1017 + $0x20] sm:$0xff]
          %v1023 = vld [vmem:[%s1017 + $0x28] sm:$0xff]
          %v1024 = vld [vmem:[%s1017 + $0x30] sm:$0xff]
          %v1025 = vld [vmem:[%s1017 + $0x38] sm:$0xff]
          %v1026 = vld [vmem:[%s1017 + $0x40] sm:$0xff]
          %v1027 = vld [vmem:[%s1017 + $0x48] sm:$0xff]
          %v1028 = vld [vmem:[%s1017 + $0x50] sm:$0xff]
          %v1029 = vld [vmem:[%s1017 + $0x58] sm:$0xff]
          %v1030 = vld [vmem:[%s1017 + $0x60] sm:$0xff]
          %v1031 = vld [vmem:[%s1017 + $0x68] sm:$0xff]
          %v1032 = vld [vmem:[%s1017 + $0x70] sm:$0xff]
          %v1033 = vld [vmem:[%s1017 + $0x78] sm:$0xff]
          %v1034 = vld [vmem:[%s1017 + $0x80] sm:$0xff]
          %v1035 = vld [vmem:[%s1017 + $0x88] sm:$0xff]
          %v1036 = vld [vmem:[%s1017 + $0x90] sm:$0xff]
          %v1037 = vld [vmem:[%s1017 + $0x98] sm:$0xff]
          %v1038 = vld [vmem:[%s1017 + $0xa0] sm:$0xff]
          %v1039 = vld [vmem:[%s1017 + $0xa8] sm:$0xff]
          %v1040 = vld [vmem:[%s1017 + $0xb0] sm:$0xff]
          %v1041 = vld [vmem:[%s1017 + $0xb8] sm:$0xff]
          %v1042 = vld [vmem:[%s1017 + $0xc0] sm:$0xff]
          %v1043 = vld [vmem:[%s1017 + $0xc8] sm:$0xff]
          %v1044 = vld [vmem:[%s1017 + $0xd0] sm:$0xff]
          %v1045 = vld [vmem:[%s1017 + $0xd8] sm:$0xff]
          %v1046 = vld [vmem:[%s1017 + $0xe0] sm:$0xff]
          %v1047 = vld [vmem:[%s1017 + $0xe8] sm:$0xff]
          %v1048 = vld [vmem:[%s1017 + $0xf0] sm:$0xff]
          %v1049 = vld [vmem:[%s1017 + $0xf8] sm:$0xff]
          %v1050 = vld [vmem:[%s1017 + $0x100] sm:$0xff]
          %v1051 = vld [vmem:[%s1017 + $0x108] sm:$0xff]
          %v1052 = vld [vmem:[%s1017 + $0x110] sm:$0xff]
          %v1053 = vld [vmem:[%s1017 + $0x118] sm:$0xff]
          %v1054 = vld [vmem:[%s1017 + $0x120] sm:$0xff]
          %v1055 = vld [vmem:[%s1017 + $0x128] sm:$0xff]
          %v1056 = vld [vmem:[%s1017 + $0x130] sm:$0xff]
          %v1057 = vld [vmem:[%s1017 + $0x138] sm:$0xff]
          %v1058 = vld [vmem:[%s1017 + $0x140] sm:$0xff]
          %v1059 = vld [vmem:[%s1017 + $0x148] sm:$0xff]
          %v1060 = vld [vmem:[%s1017 + $0x150] sm:$0xff]
          %v1061 = vld [vmem:[%s1017 + $0x158] sm:$0xff]
          %v1062 = vld [vmem:[%s1017 + $0x160] sm:$0xff]
          %v1063 = vld [vmem:[%s1017 + $0x168] sm:$0xff]
          %v1064 = vld [vmem:[%s1017 + $0x170] sm:$0xff]
          %v1065 = vld [vmem:[%s1017 + $0x178] sm:$0xff]
          %v1066 = vld [vmem:[%s1017 + $0x180] sm:$0xff]
          %v1067 = vld [vmem:[%s1017 + $0x188] sm:$0xff]
          %v1068 = vld [vmem:[%s1017 + $0x190] sm:$0xff]
          %v1069 = vld [vmem:[%s1017 + $0x198] sm:$0xff]
          %v1070 = vld [vmem:[%s1017 + $0x1a0] sm:$0xff]
          %v1071 = vld [vmem:[%s1017 + $0x1a8] sm:$0xff]
          %v1072 = vld [vmem:[%s1017 + $0x1b0] sm:$0xff]
          %v1073 = vld [vmem:[%s1017 + $0x1b8] sm:$0xff]
          %v1074 = vld [vmem:[%s1017 + $0x1c0] sm:$0xff]
          %v1075 = vld [vmem:[%s1017 + $0x1c8] sm:$0xff]
          %v1076 = vld [vmem:[%s1017 + $0x1d0] sm:$0xff]
          %v1077 = vld [vmem:[%s1017 + $0x1d8] sm:$0xff]
          %v1078 = vld [vmem:[%s1017 + $0x1e0] sm:$0xff]
          %v1079 = vld [vmem:[%s1017 + $0x1e8] sm:$0xff]
          %v1080 = vld [vmem:[%s1017 + $0x1f0] sm:$0xff]
          %v1081 = vld [vmem:[%s1017 + $0x1f8] sm:$0xff]
          %s1082 = scalar_lea.vmem %s5, 4
          %v1083 = vld [vmem:[%s1082] sm:$0xf]
          %v1085 = vlaneseq
          %v1086 = vshrl.u32 %v1085, 7
          %v1087 = vsub.s32 0, %v1086
          %v1088 = vrot.slane %v1083, %v1087
          %v1089 = vlaneseq
          %v1090 = vshrl.u32 %v1089, 7
          %v1091 = vsub.s32 1, %v1090
          %v1092 = vrot.slane %v1083, %v1091
          %v1093 = vlaneseq
          %v1094 = vshrl.u32 %v1093, 7
          %v1095 = vsub.s32 2, %v1094
          %v1096 = vrot.slane %v1083, %v1095
          %v1097 = vlaneseq
          %v1098 = vshrl.u32 %v1097, 7
          %v1099 = vsub.s32 3, %v1098
          %v1100 = vrot.slane %v1083, %v1099
          %v1169 = vunpack.c.l.b16 %v1018
          %v1170 = vunpack.c.h.b16 %v1018
          %v1171 = vunpack.c.l.b16 %v1019
          %v1172 = vunpack.c.h.b16 %v1019
          %v1173 = vunpack.c.l.b16 %v1020
          %v1174 = vunpack.c.h.b16 %v1020
          %v1175 = vunpack.c.l.b16 %v1021
          %v1176 = vunpack.c.h.b16 %v1021
          %v1177 = vunpack.c.l.b16 %v1022
          %v1178 = vunpack.c.h.b16 %v1022
          %v1179 = vunpack.c.l.b16 %v1023
          %v1180 = vunpack.c.h.b16 %v1023
          %v1181 = vunpack.c.l.b16 %v1024
          %v1182 = vunpack.c.h.b16 %v1024
          %v1183 = vunpack.c.l.b16 %v1025
          %v1184 = vunpack.c.h.b16 %v1025
          %v1185 = vunpack.c.l.b16 %v1026
          %v1186 = vunpack.c.h.b16 %v1026
          %v1187 = vunpack.c.l.b16 %v1027
          %v1188 = vunpack.c.h.b16 %v1027
          %v1189 = vunpack.c.l.b16 %v1028
          %v1190 = vunpack.c.h.b16 %v1028
          %v1191 = vunpack.c.l.b16 %v1029
          %v1192 = vunpack.c.h.b16 %v1029
          %v1193 = vunpack.c.l.b16 %v1030
          %v1194 = vunpack.c.h.b16 %v1030
          %v1195 = vunpack.c.l.b16 %v1031
          %v1196 = vunpack.c.h.b16 %v1031
          %v1197 = vunpack.c.l.b16 %v1032
          %v1198 = vunpack.c.h.b16 %v1032
          %v1199 = vunpack.c.l.b16 %v1033
          %v1200 = vunpack.c.h.b16 %v1033
          %v1201 = vunpack.c.l.b16 %v1034
          %v1202 = vunpack.c.h.b16 %v1034
          %v1203 = vunpack.c.l.b16 %v1035
          %v1204 = vunpack.c.h.b16 %v1035
          %v1205 = vunpack.c.l.b16 %v1036
          %v1206 = vunpack.c.h.b16 %v1036
          %v1207 = vunpack.c.l.b16 %v1037
          %v1208 = vunpack.c.h.b16 %v1037
          %v1209 = vunpack.c.l.b16 %v1038
          %v1210 = vunpack.c.h.b16 %v1038
          %v1211 = vunpack.c.l.b16 %v1039
          %v1212 = vunpack.c.h.b16 %v1039
          %v1213 = vunpack.c.l.b16 %v1040
          %v1214 = vunpack.c.h.b16 %v1040
          %v1215 = vunpack.c.l.b16 %v1041
          %v1216 = vunpack.c.h.b16 %v1041
          %v1217 = vunpack.c.l.b16 %v1042
          %v1218 = vunpack.c.h.b16 %v1042
          %v1219 = vunpack.c.l.b16 %v1043
          %v1220 = vunpack.c.h.b16 %v1043
          %v1221 = vunpack.c.l.b16 %v1044
          %v1222 = vunpack.c.h.b16 %v1044
          %v1223 = vunpack.c.l.b16 %v1045
          %v1224 = vunpack.c.h.b16 %v1045
          %v1225 = vunpack.c.l.b16 %v1046
          %v1226 = vunpack.c.h.b16 %v1046
          %v1227 = vunpack.c.l.b16 %v1047
          %v1228 = vunpack.c.h.b16 %v1047
          %v1229 = vunpack.c.l.b16 %v1048
          %v1230 = vunpack.c.h.b16 %v1048
          %v1231 = vunpack.c.l.b16 %v1049
          %v1232 = vunpack.c.h.b16 %v1049
          %v1233 = vunpack.c.l.b16 %v1050
          %v1234 = vunpack.c.h.b16 %v1050
          %v1235 = vunpack.c.l.b16 %v1051
          %v1236 = vunpack.c.h.b16 %v1051
          %v1237 = vunpack.c.l.b16 %v1052
          %v1238 = vunpack.c.h.b16 %v1052
          %v1239 = vunpack.c.l.b16 %v1053
          %v1240 = vunpack.c.h.b16 %v1053
          %v1241 = vunpack.c.l.b16 %v1054
          %v1242 = vunpack.c.h.b16 %v1054
          %v1243 = vunpack.c.l.b16 %v1055
          %v1244 = vunpack.c.h.b16 %v1055
          %v1245 = vunpack.c.l.b16 %v1056
          %v1246 = vunpack.c.h.b16 %v1056
          %v1247 = vunpack.c.l.b16 %v1057
          %v1248 = vunpack.c.h.b16 %v1057
          %v1249 = vunpack.c.l.b16 %v1058
          %v1250 = vunpack.c.h.b16 %v1058
          %v1251 = vunpack.c.l.b16 %v1059
          %v1252 = vunpack.c.h.b16 %v1059
          %v1253 = vunpack.c.l.b16 %v1060
          %v1254 = vunpack.c.h.b16 %v1060
          %v1255 = vunpack.c.l.b16 %v1061
          %v1256 = vunpack.c.h.b16 %v1061
          %v1257 = vunpack.c.l.b16 %v1062
          %v1258 = vunpack.c.h.b16 %v1062
          %v1259 = vunpack.c.l.b16 %v1063
          %v1260 = vunpack.c.h.b16 %v1063
          %v1261 = vunpack.c.l.b16 %v1064
          %v1262 = vunpack.c.h.b16 %v1064
          %v1263 = vunpack.c.l.b16 %v1065
          %v1264 = vunpack.c.h.b16 %v1065
          %v1265 = vunpack.c.l.b16 %v1066
          %v1266 = vunpack.c.h.b16 %v1066
          %v1267 = vunpack.c.l.b16 %v1067
          %v1268 = vunpack.c.h.b16 %v1067
          %v1269 = vunpack.c.l.b16 %v1068
          %v1270 = vunpack.c.h.b16 %v1068
          %v1271 = vunpack.c.l.b16 %v1069
          %v1272 = vunpack.c.h.b16 %v1069
          %v1273 = vunpack.c.l.b16 %v1070
          %v1274 = vunpack.c.h.b16 %v1070
          %v1275 = vunpack.c.l.b16 %v1071
          %v1276 = vunpack.c.h.b16 %v1071
          %v1277 = vunpack.c.l.b16 %v1072
          %v1278 = vunpack.c.h.b16 %v1072
          %v1279 = vunpack.c.l.b16 %v1073
          %v1280 = vunpack.c.h.b16 %v1073
          %v1281 = vunpack.c.l.b16 %v1074
          %v1282 = vunpack.c.h.b16 %v1074
          %v1283 = vunpack.c.l.b16 %v1075
          %v1284 = vunpack.c.h.b16 %v1075
          %v1285 = vunpack.c.l.b16 %v1076
          %v1286 = vunpack.c.h.b16 %v1076
          %v1287 = vunpack.c.l.b16 %v1077
          %v1288 = vunpack.c.h.b16 %v1077
          %v1289 = vunpack.c.l.b16 %v1078
          %v1290 = vunpack.c.h.b16 %v1078
          %v1291 = vunpack.c.l.b16 %v1079
          %v1292 = vunpack.c.h.b16 %v1079
          %v1293 = vunpack.c.l.b16 %v1080
          %v1294 = vunpack.c.h.b16 %v1080
          %v1295 = vunpack.c.l.b16 %v1081
          %v1296 = vunpack.c.h.b16 %v1081
          %v1297 = vpack.c.b16 %v1173, %v1169
          %v1298 = vpack.c.b16 %v1174, %v1170
          %v1299 = vpack.c.b16 %v1175, %v1171
          %v1300 = vpack.c.b16 %v1176, %v1172
          %v1301 = vpack.c.b16 %v1181, %v1177
          %v1302 = vpack.c.b16 %v1182, %v1178
          %v1303 = vpack.c.b16 %v1183, %v1179
          %v1304 = vpack.c.b16 %v1184, %v1180
          %v1305 = vpack.c.b16 %v1189, %v1185
          %v1306 = vpack.c.b16 %v1190, %v1186
          %v1307 = vpack.c.b16 %v1191, %v1187
          %v1308 = vpack.c.b16 %v1192, %v1188
          %v1309 = vpack.c.b16 %v1197, %v1193
          %v1310 = vpack.c.b16 %v1198, %v1194
          %v1311 = vpack.c.b16 %v1199, %v1195
          %v1312 = vpack.c.b16 %v1200, %v1196
          %v1313 = vpack.c.b16 %v1205, %v1201
          %v1314 = vpack.c.b16 %v1206, %v1202
          %v1315 = vpack.c.b16 %v1207, %v1203
          %v1316 = vpack.c.b16 %v1208, %v1204
          %v1317 = vpack.c.b16 %v1213, %v1209
          %v1318 = vpack.c.b16 %v1214, %v1210
          %v1319 = vpack.c.b16 %v1215, %v1211
          %v1320 = vpack.c.b16 %v1216, %v1212
          %v1321 = vpack.c.b16 %v1221, %v1217
          %v1322 = vpack.c.b16 %v1222, %v1218
          %v1323 = vpack.c.b16 %v1223, %v1219
          %v1324 = vpack.c.b16 %v1224, %v1220
          %v1325 = vpack.c.b16 %v1229, %v1225
          %v1326 = vpack.c.b16 %v1230, %v1226
          %v1327 = vpack.c.b16 %v1231, %v1227
          %v1328 = vpack.c.b16 %v1232, %v1228
          %v1329 = vpack.c.b16 %v1237, %v1233
          %v1330 = vpack.c.b16 %v1238, %v1234
          %v1331 = vpack.c.b16 %v1239, %v1235
          %v1332 = vpack.c.b16 %v1240, %v1236
          %v1333 = vpack.c.b16 %v1245, %v1241
          %v1334 = vpack.c.b16 %v1246, %v1242
          %v1335 = vpack.c.b16 %v1247, %v1243
          %v1336 = vpack.c.b16 %v1248, %v1244
          %v1337 = vpack.c.b16 %v1253, %v1249
          %v1338 = vpack.c.b16 %v1254, %v1250
          %v1339 = vpack.c.b16 %v1255, %v1251
          %v1340 = vpack.c.b16 %v1256, %v1252
          %v1341 = vpack.c.b16 %v1261, %v1257
          %v1342 = vpack.c.b16 %v1262, %v1258
          %v1343 = vpack.c.b16 %v1263, %v1259
          %v1344 = vpack.c.b16 %v1264, %v1260
          %v1345 = vpack.c.b16 %v1269, %v1265
          %v1346 = vpack.c.b16 %v1270, %v1266
          %v1347 = vpack.c.b16 %v1271, %v1267
          %v1348 = vpack.c.b16 %v1272, %v1268
          %v1349 = vpack.c.b16 %v1277, %v1273
          %v1350 = vpack.c.b16 %v1278, %v1274
          %v1351 = vpack.c.b16 %v1279, %v1275
          %v1352 = vpack.c.b16 %v1280, %v1276
          %v1353 = vpack.c.b16 %v1285, %v1281
          %v1354 = vpack.c.b16 %v1286, %v1282
          %v1355 = vpack.c.b16 %v1287, %v1283
          %v1356 = vpack.c.b16 %v1288, %v1284
          %v1357 = vpack.c.b16 %v1293, %v1289
          %v1358 = vpack.c.b16 %v1294, %v1290
          %v1359 = vpack.c.b16 %v1295, %v1291
          %v1360 = vpack.c.b16 %v1296, %v1292
          %1425 = vmatprep.subr.bf16.mxu0 %v1298
          %1426 = vmatpush1.bf16.msra.mxu0 %v1297
          %1427 = vmatprep.subr.bf16.mxu0 %v1302
          %1428 = vmatpush1.bf16.msra.mxu0 %v1301
          %1429 = vmatprep.subr.bf16.mxu0 %v1306
          %1430 = vmatpush1.bf16.msra.mxu0 %v1305
          %1431 = vmatprep.subr.bf16.mxu0 %v1310
          %1432 = vmatpush1.bf16.msra.mxu0 %v1309
          %1433 = vmatprep.subr.bf16.mxu0 %v1314
          %1434 = vmatpush1.bf16.msra.mxu0 %v1313
          %1435 = vmatprep.subr.bf16.mxu0 %v1318
          %1436 = vmatpush1.bf16.msra.mxu0 %v1317
          %1437 = vmatprep.subr.bf16.mxu0 %v1322
          %1438 = vmatpush1.bf16.msra.mxu0 %v1321
          %1439 = vmatprep.subr.bf16.mxu0 %v1326
          %1440 = vmatpush1.bf16.msra.mxu0 %v1325
          %1441 = vmatprep.subr.bf16.mxu0 %v1330
          %1442 = vmatpush1.bf16.msra.mxu0 %v1329
          %1443 = vmatprep.subr.bf16.mxu0 %v1334
          %1444 = vmatpush1.bf16.msra.mxu0 %v1333
          %1445 = vmatprep.subr.bf16.mxu0 %v1338
          %1446 = vmatpush1.bf16.msra.mxu0 %v1337
          %1447 = vmatprep.subr.bf16.mxu0 %v1342
          %1448 = vmatpush1.bf16.msra.mxu0 %v1341
          %1449 = vmatprep.subr.bf16.mxu0 %v1346
          %1450 = vmatpush1.bf16.msra.mxu0 %v1345
          %1451 = vmatprep.subr.bf16.mxu0 %v1350
          %1452 = vmatpush1.bf16.msra.mxu0 %v1349
          %1453 = vmatprep.subr.bf16.mxu0 %v1354
          %1454 = vmatpush1.bf16.msra.mxu0 %v1353
          %1455 = vmatprep.subr.bf16.mxu0 %v1358
          %1456 = vmatpush1.bf16.msra.mxu0 %v1357
          %1457 = vmatprep.mubr.bf16.mxu0 %v1016
          %1458 = vmatmul.mubr.bf16.gmra.mrb[0].mxu0 %v1015
          %v1459 = vpop.f32.mrb[0].mxu0
          %v1460 = vadd.f32 %v1088, %v1459
          %v1461 = vpop.f32.mrb[0].mxu0
          %v1462 = vadd.f32 %v1092, %v1461
          %v1463 = vpop.f32.mrb[0].mxu0
          %v1464 = vpop.f32.mrb[0].mxu0
          %1465 = vdwg.mxu0
          %1466 = vmatprep.subr.bf16.mxu0 %v1300
          %1467 = vmatpush1.bf16.msra.mxu0 %v1299
          %1468 = vmatprep.subr.bf16.mxu0 %v1304
          %1469 = vmatpush1.bf16.msra.mxu0 %v1303
          %1470 = vmatprep.subr.bf16.mxu0 %v1308
          %1471 = vmatpush1.bf16.msra.mxu0 %v1307
          %1472 = vmatprep.subr.bf16.mxu0 %v1312
          %1473 = vmatpush1.bf16.msra.mxu0 %v1311
          %1474 = vmatprep.subr.bf16.mxu0 %v1316
          %1475 = vmatpush1.bf16.msra.mxu0 %v1315
          %1476 = vmatprep.subr.bf16.mxu0 %v1320
          %1477 = vmatpush1.bf16.msra.mxu0 %v1319
          %1478 = vmatprep.subr.bf16.mxu0 %v1324
          %1479 = vmatpush1.bf16.msra.mxu0 %v1323
          %1480 = vmatprep.subr.bf16.mxu0 %v1328
          %1481 = vmatpush1.bf16.msra.mxu0 %v1327
          %1482 = vmatprep.subr.bf16.mxu0 %v1332
          %1483 = vmatpush1.bf16.msra.mxu0 %v1331
          %1484 = vmatprep.subr.bf16.mxu0 %v1336
          %1485 = vmatpush1.bf16.msra.mxu0 %v1335
          %1486 = vmatprep.subr.bf16.mxu0 %v1340
          %1487 = vmatpush1.bf16.msra.mxu0 %v1339
          %1488 = vmatprep.subr.bf16.mxu0 %v1344
          %1489 = vmatpush1.bf16.msra.mxu0 %v1343
          %1490 = vmatprep.subr.bf16.mxu0 %v1348
          %1491 = vmatpush1.bf16.msra.mxu0 %v1347
          %1492 = vmatprep.subr.bf16.mxu0 %v1352
          %1493 = vmatpush1.bf16.msra.mxu0 %v1351
          %1494 = vmatprep.subr.bf16.mxu0 %v1356
          %1495 = vmatpush1.bf16.msra.mxu0 %v1355
          %1496 = vmatprep.subr.bf16.mxu0 %v1360
          %1497 = vmatpush1.bf16.msra.mxu0 %v1359
          %1498 = vmatprep.mubr.bf16.mxu0 %v1016
          %1499 = vmatmul.mubr.bf16.gmra.mrb[0].mxu0 %v1015
          %v1500 = vpop.f32.mrb[0].mxu0
          %v1501 = vadd.f32 %v1096, %v1500
          %v1502 = vpop.f32.mrb[0].mxu0
          %v1503 = vadd.f32 %v1100, %v1502
          %v1504 = vpop.f32.mrb[0].mxu0
          %v1505 = vpop.f32.mrb[0].mxu0
          %1506 = vdwg.mxu0
          %v1507 = vmul.f32 %v1460, 0.5
          %v1508 = vtanh.pop %v1507
          %v1509 = vmul.f32 %v1508, 0.5
          %v1510 = vadd.f32 %v1509, 0.5
          %v1511 = vmul.f32 %v1462, 0.5
          %v1512 = vtanh.pop %v1511
          %v1513 = vmul.f32 %v1512, 0.5
          %v1514 = vadd.f32 %v1513, 0.5
          %v1515 = vtanh.pop %v1501
          %v1516 = vmul.f32 %v1503, 0.5
          %v1517 = vtanh.pop %v1516
          %v1518 = vmul.f32 %v1517, 0.5
          %v1519 = vadd.f32 %v1518, 0.5
          %v1520 = vmul.f32 %v1514, %v1010
          %v1521 = vmul.f32 %v1510, %v1515
          %v1522 = vadd.f32 %v1520, %v1521
          %v1523 = vtanh.pop %v1522
          %v1524 = vmul.f32 %v1519, %v1523
          %s1525 = scalar_lea.vmem [#allocation20], 8
          %1526 = vst [vmem:[%s1525] sm:$0xff] %v1524
          %s1527 = scalar_lea.vmem [#allocation22], 8
          %1528 = vst [vmem:[%s1527] sm:$0xff] %v1522
          %v1529 = vld [vmem:[#allocation13] sm:$0xf]
          %v1530 = vld [vmem:[#allocation13 + $0x4] sm:$0xf]
          %v1531 = vld [vmem:[#allocation13 + $0x8] sm:$0xf]
          %v1532 = vld [vmem:[#allocation13 + $0xc] sm:$0xf]
          %v1533 = vld [vmem:[#allocation13 + $0x10] sm:$0xf]
          %v1534 = vld [vmem:[#allocation13 + $0x14] sm:$0xf]
          %v1535 = vld [vmem:[#allocation13 + $0x18] sm:$0xf]
          %v1536 = vld [vmem:[#allocation13 + $0x1c] sm:$0xf]
          %v1537 = vunpack.c.l.bf16 %v1529
          %v1538 = vunpack.c.l.bf16 %v1530
          %v1539 = vunpack.c.l.bf16 %v1531
          %v1540 = vunpack.c.l.bf16 %v1532
          %v1541 = vunpack.c.l.bf16 %v1533
          %v1542 = vunpack.c.l.bf16 %v1534
          %v1543 = vunpack.c.l.bf16 %v1535
          %v1544 = vunpack.c.l.bf16 %v1536
          %v1546 = vcombine.high %v1524, %v1524
          %v1548 = vunpack.c.l.s4 1966171168
          %v1549 = vunpack.c.0.s8 %v1548
          %v1550 = vlaneseq
          %v1551 = vshrl.u32 %v1550, 7
          %v1552 = vsub.s32 %v1549, %v1551
          %v1553 = vrot.slane %v1524, %v1552
          %v1555 = vunpack.c.l.s4 1966171168
          %v1556 = vunpack.c.0.s8 %v1555
          %v1557 = vlaneseq
          %v1558 = vshrl.u32 %v1557, 7
          %v1559 = vsub.s32 %v1556, %v1558
          %v1560 = vrot.slane %v1546, %v1559
          %v1561 = vcombine.high %v1553, %v1553
          %v1562 = vcombine.high %v1560, %v1560
          %v1564 = vunpack.c.l.s4 1966171168
          %v1565 = vunpack.c.0.s8 %v1564
          %v1566 = vlaneseq
          %v1567 = vshrl.u32 %v1566, 7
          %v1568 = vsub.s32 %v1565, %v1567
          %v1569 = vrot.slane %v1553, %v1568
          %v1571 = vunpack.c.l.s4 1966171168
          %v1572 = vunpack.c.0.s8 %v1571
          %v1573 = vlaneseq
          %v1574 = vshrl.u32 %v1573, 7
          %v1575 = vsub.s32 %v1572, %v1574
          %v1576 = vrot.slane %v1560, %v1575
          %v1578 = vunpack.c.l.s4 1966171168
          %v1579 = vunpack.c.0.s8 %v1578
          %v1580 = vlaneseq
          %v1581 = vshrl.u32 %v1580, 7
          %v1582 = vsub.s32 %v1579, %v1581
          %v1583 = vrot.slane %v1561, %v1582
          %v1585 = vunpack.c.l.s4 1966171168
          %v1586 = vunpack.c.0.s8 %v1585
          %v1587 = vlaneseq
          %v1588 = vshrl.u32 %v1587, 7
          %v1589 = vsub.s32 %v1586, %v1588
          %v1590 = vrot.slane %v1562, %v1589
          %v1591 = vcombine.high %v1569, %v1569
          %v1592 = vcombine.high %v1576, %v1576
          %v1593 = vcombine.high %v1583, %v1583
          %v1594 = vcombine.high %v1590, %v1590
          %v1595 = vlaneseq
          %v1596 = vshrl.u32 %v1595, 7
          %v1597 = vsub.s32 0, %v1596
          %v1598 = vrot.slane %v1569, %v1597
          %v1599 = vlaneseq
          %v1600 = vshrl.u32 %v1599, 7
          %v1601 = vsub.s32 0, %v1600
          %v1602 = vrot.slane %v1583, %v1601
          %v1603 = vlaneseq
          %v1604 = vshrl.u32 %v1603, 7
          %v1605 = vsub.s32 0, %v1604
          %v1606 = vrot.slane %v1591, %v1605
          %v1607 = vlaneseq
          %v1608 = vshrl.u32 %v1607, 7
          %v1609 = vsub.s32 0, %v1608
          %v1610 = vrot.slane %v1593, %v1609
          %v1611 = vlaneseq
          %v1612 = vshrl.u32 %v1611, 7
          %v1613 = vsub.s32 0, %v1612
          %v1614 = vrot.slane %v1576, %v1613
          %v1615 = vlaneseq
          %v1616 = vshrl.u32 %v1615, 7
          %v1617 = vsub.s32 0, %v1616
          %v1618 = vrot.slane %v1590, %v1617
          %v1619 = vlaneseq
          %v1620 = vshrl.u32 %v1619, 7
          %v1621 = vsub.s32 0, %v1620
          %v1622 = vrot.slane %v1592, %v1621
          %v1623 = vlaneseq
          %v1624 = vshrl.u32 %v1623, 7
          %v1625 = vsub.s32 0, %v1624
          %v1626 = vrot.slane %v1594, %v1625
          %v1635 = vmul.f32 %v1598, %v1537
          %v1636 = vmul.f32 %v1602, %v1538
          %v1637 = vmul.f32 %v1606, %v1539
          %v1638 = vmul.f32 %v1610, %v1540
          %v1639 = vmul.f32 %v1614, %v1541
          %v1640 = vmul.f32 %v1618, %v1542
          %v1641 = vmul.f32 %v1622, %v1543
          %v1642 = vmul.f32 %v1626, %v1544
          %1643 = vadd.xlane.f32.xlu0 %v1635
          %v1644 = vpop.xlane.xlu0 %1643
          %1645 = vadd.xlane.f32.xlu0 %v1636
          %v1646 = vpop.xlane.xlu0 %1645
          %1647 = vadd.xlane.f32.xlu0 %v1637
          %v1648 = vpop.xlane.xlu0 %1647
          %1649 = vadd.xlane.f32.xlu0 %v1638
          %v1650 = vpop.xlane.xlu0 %1649
          %1651 = vadd.xlane.f32.xlu0 %v1639
          %v1652 = vpop.xlane.xlu0 %1651
          %1653 = vadd.xlane.f32.xlu0 %v1640
          %v1654 = vpop.xlane.xlu0 %1653
          %1655 = vadd.xlane.f32.xlu0 %v1641
          %v1656 = vpop.xlane.xlu0 %1655
          %1657 = vadd.xlane.f32.xlu0 %v1642
          %v1658 = vpop.xlane.xlu0 %1657
          %v1659 = vmul.f32 %v1644, %v1537
          %v1660 = vmul.f32 %v1646, %v1538
          %v1661 = vmul.f32 %v1648, %v1539
          %v1662 = vmul.f32 %v1650, %v1540
          %v1663 = vmul.f32 %v1652, %v1541
          %v1664 = vmul.f32 %v1654, %v1542
          %v1665 = vmul.f32 %v1656, %v1543
          %v1666 = vmul.f32 %v1658, %v1544
          %v1667 = vrot.slane %v1659, 4
          %v1668 = vadd.f32 %v1659, %v1667
          %v1669 = vrot.slane %v1668, 2
          %v1670 = vadd.f32 %v1668, %v1669
          %v1671 = vrot.slane %v1670, 1
          %v1672 = vadd.f32 %v1670, %v1671
          %v1673 = vrot.slane %v1660, 4
          %v1674 = vadd.f32 %v1660, %v1673
          %v1675 = vrot.slane %v1674, 2
          %v1676 = vadd.f32 %v1674, %v1675
          %v1677 = vrot.slane %v1676, 1
          %v1678 = vadd.f32 %v1676, %v1677
          %v1679 = vrot.slane %v1661, 4
          %v1680 = vadd.f32 %v1661, %v1679
          %v1681 = vrot.slane %v1680, 2
          %v1682 = vadd.f32 %v1680, %v1681
          %v1683 = vrot.slane %v1682, 1
          %v1684 = vadd.f32 %v1682, %v1683
          %v1685 = vrot.slane %v1662, 4
          %v1686 = vadd.f32 %v1662, %v1685
          %v1687 = vrot.slane %v1686, 2
          %v1688 = vadd.f32 %v1686, %v1687
          %v1689 = vrot.slane %v1688, 1
          %v1690 = vadd.f32 %v1688, %v1689
          %v1691 = vrot.slane %v1663, 4
          %v1692 = vadd.f32 %v1663, %v1691
          %v1693 = vrot.slane %v1692, 2
          %v1694 = vadd.f32 %v1692, %v1693
          %v1695 = vrot.slane %v1694, 1
          %v1696 = vadd.f32 %v1694, %v1695
          %v1697 = vrot.slane %v1664, 4
          %v1698 = vadd.f32 %v1664, %v1697
          %v1699 = vrot.slane %v1698, 2
          %v1700 = vadd.f32 %v1698, %v1699
          %v1701 = vrot.slane %v1700, 1
          %v1702 = vadd.f32 %v1700, %v1701
          %v1703 = vrot.slane %v1665, 4
          %v1704 = vadd.f32 %v1665, %v1703
          %v1705 = vrot.slane %v1704, 2
          %v1706 = vadd.f32 %v1704, %v1705
          %v1707 = vrot.slane %v1706, 1
          %v1708 = vadd.f32 %v1706, %v1707
          %v1709 = vrot.slane %v1666, 4
          %v1710 = vadd.f32 %v1666, %v1709
          %v1711 = vrot.slane %v1710, 2
          %v1712 = vadd.f32 %v1710, %v1711
          %v1713 = vrot.slane %v1712, 1
          %v1714 = vadd.f32 %v1712, %v1713
          %1715 = vst [vmem:[#allocation2] sm:$0xff] %v1524
          %vm1724 = vcmask 1041409
          %v1725 = vsel %vm1724, %v1678, %v1672
          %vm1726 = vcmask 1042434
          %v1727 = vsel %vm1726, %v1684, %v1725
          %vm1728 = vcmask 1043459
          %v1729 = vsel %vm1728, %v1690, %v1727
          %vm1730 = vcmask 1044484
          %v1731 = vsel %vm1730, %v1696, %v1729
          %vm1732 = vcmask 1045509
          %v1733 = vsel %vm1732, %v1702, %v1731
          %vm1734 = vcmask 1046534
          %v1735 = vsel %vm1734, %v1708, %v1733
          %vm1736 = vcmask 1047559
          %v1737 = vsel %vm1736, %v1714, %v1735
          %1739 = vst [vmem:[#allocation2 + $0x8] sm:$0xff] %v1737
          %v1740 = vld [vmem:[#allocation2] sm:$0xff]
          %v1741 = vld [vmem:[#allocation2 + $0x8] sm:$0xff]
          %v1742 = vpack.c.bf16 %v1740, %v1740
          %v1743 = vpack.c.bf16 %v1741, %v1741
          %v1744 = vld [vmem:[#allocation16] sm:$0xf]
          %v1745 = vld [vmem:[#allocation16 + $0x4] sm:$0xf]
          %v1746 = vld [vmem:[#allocation16 + $0x8] sm:$0xf]
          %v1747 = vld [vmem:[#allocation16 + $0xc] sm:$0xf]
          %v1748 = vld [vmem:[#allocation16 + $0x10] sm:$0xf]
          %v1749 = vld [vmem:[#allocation16 + $0x14] sm:$0xf]
          %v1750 = vld [vmem:[#allocation16 + $0x18] sm:$0xf]
          %v1751 = vld [vmem:[#allocation16 + $0x1c] sm:$0xf]
          %v1752 = vld [vmem:[#allocation16 + $0x20] sm:$0xf]
          %v1753 = vld [vmem:[#allocation16 + $0x24] sm:$0xf]
          %v1754 = vld [vmem:[#allocation16 + $0x28] sm:$0xf]
          %v1755 = vld [vmem:[#allocation16 + $0x2c] sm:$0xf]
          %v1756 = vld [vmem:[#allocation16 + $0x30] sm:$0xf]
          %v1757 = vld [vmem:[#allocation16 + $0x34] sm:$0xf]
          %v1758 = vld [vmem:[#allocation16 + $0x38] sm:$0xf]
          %v1759 = vld [vmem:[#allocation16 + $0x3c] sm:$0xf]
          %v1760 = vld [vmem:[#allocation16 + $0x40] sm:$0xf]
          %v1761 = vld [vmem:[#allocation16 + $0x44] sm:$0xf]
          %v1762 = vld [vmem:[#allocation16 + $0x48] sm:$0xf]
          %v1763 = vld [vmem:[#allocation16 + $0x4c] sm:$0xf]
          %v1764 = vld [vmem:[#allocation16 + $0x50] sm:$0xf]
          %v1765 = vld [vmem:[#allocation16 + $0x54] sm:$0xf]
          %v1766 = vld [vmem:[#allocation16 + $0x58] sm:$0xf]
          %v1767 = vld [vmem:[#allocation16 + $0x5c] sm:$0xf]
          %v1768 = vld [vmem:[#allocation16 + $0x60] sm:$0xf]
          %v1769 = vld [vmem:[#allocation16 + $0x64] sm:$0xf]
          %v1770 = vld [vmem:[#allocation16 + $0x68] sm:$0xf]
          %v1771 = vld [vmem:[#allocation16 + $0x6c] sm:$0xf]
          %v1772 = vld [vmem:[#allocation16 + $0x70] sm:$0xf]
          %v1773 = vld [vmem:[#allocation16 + $0x74] sm:$0xf]
          %v1774 = vld [vmem:[#allocation16 + $0x78] sm:$0xf]
          %v1775 = vld [vmem:[#allocation16 + $0x7c] sm:$0xf]
          %v1808 = vunpack.c.l.b16 %v1744
          %v1809 = vunpack.c.l.b16 %v1745
          %v1810 = vunpack.c.l.b16 %v1746
          %v1811 = vunpack.c.l.b16 %v1747
          %v1812 = vunpack.c.l.b16 %v1748
          %v1813 = vunpack.c.l.b16 %v1749
          %v1814 = vunpack.c.l.b16 %v1750
          %v1815 = vunpack.c.l.b16 %v1751
          %v1816 = vunpack.c.l.b16 %v1752
          %v1817 = vunpack.c.l.b16 %v1753
          %v1818 = vunpack.c.l.b16 %v1754
          %v1819 = vunpack.c.l.b16 %v1755
          %v1820 = vunpack.c.l.b16 %v1756
          %v1821 = vunpack.c.l.b16 %v1757
          %v1822 = vunpack.c.l.b16 %v1758
          %v1823 = vunpack.c.l.b16 %v1759
          %v1824 = vunpack.c.l.b16 %v1760
          %v1825 = vunpack.c.l.b16 %v1761
          %v1826 = vunpack.c.l.b16 %v1762
          %v1827 = vunpack.c.l.b16 %v1763
          %v1828 = vunpack.c.l.b16 %v1764
          %v1829 = vunpack.c.l.b16 %v1765
          %v1830 = vunpack.c.l.b16 %v1766
          %v1831 = vunpack.c.l.b16 %v1767
          %v1832 = vunpack.c.l.b16 %v1768
          %v1833 = vunpack.c.l.b16 %v1769
          %v1834 = vunpack.c.l.b16 %v1770
          %v1835 = vunpack.c.l.b16 %v1771
          %v1836 = vunpack.c.l.b16 %v1772
          %v1837 = vunpack.c.l.b16 %v1773
          %v1838 = vunpack.c.l.b16 %v1774
          %v1839 = vunpack.c.l.b16 %v1775
          %v1840 = vpack.c.b16 %v1809, %v1808
          %v1841 = vpack.c.b16 %v1811, %v1810
          %v1842 = vpack.c.b16 %v1813, %v1812
          %v1843 = vpack.c.b16 %v1815, %v1814
          %v1844 = vpack.c.b16 %v1817, %v1816
          %v1845 = vpack.c.b16 %v1819, %v1818
          %v1846 = vpack.c.b16 %v1821, %v1820
          %v1847 = vpack.c.b16 %v1823, %v1822
          %v1848 = vpack.c.b16 %v1825, %v1824
          %v1849 = vpack.c.b16 %v1827, %v1826
          %v1850 = vpack.c.b16 %v1829, %v1828
          %v1851 = vpack.c.b16 %v1831, %v1830
          %v1852 = vpack.c.b16 %v1833, %v1832
          %v1853 = vpack.c.b16 %v1835, %v1834
          %v1854 = vpack.c.b16 %v1837, %v1836
          %v1855 = vpack.c.b16 %v1839, %v1838
          %1872 = vmatprep.subr.bf16.mxu0 0
          %1873 = vmatpush1.bf16.msra.mxu0 %v1840
          %1874 = vmatprep.subr.bf16.mxu0 0
          %1875 = vmatpush1.bf16.msra.mxu0 %v1841
          %1876 = vmatprep.subr.bf16.mxu0 0
          %1877 = vmatpush1.bf16.msra.mxu0 %v1842
          %1878 = vmatprep.subr.bf16.mxu0 0
          %1879 = vmatpush1.bf16.msra.mxu0 %v1843
          %1880 = vmatprep.subr.bf16.mxu0 0
          %1881 = vmatpush1.bf16.msra.mxu0 %v1844
          %1882 = vmatprep.subr.bf16.mxu0 0
          %1883 = vmatpush1.bf16.msra.mxu0 %v1845
          %1884 = vmatprep.subr.bf16.mxu0 0
          %1885 = vmatpush1.bf16.msra.mxu0 %v1846
          %1886 = vmatprep.subr.bf16.mxu0 0
          %1887 = vmatpush1.bf16.msra.mxu0 %v1847
          %1888 = vmatprep.subr.bf16.mxu0 0
          %1889 = vmatpush1.bf16.msra.mxu0 %v1848
          %1890 = vmatprep.subr.bf16.mxu0 0
          %1891 = vmatpush1.bf16.msra.mxu0 %v1849
          %1892 = vmatprep.subr.bf16.mxu0 0
          %1893 = vmatpush1.bf16.msra.mxu0 %v1850
          %1894 = vmatprep.subr.bf16.mxu0 0
          %1895 = vmatpush1.bf16.msra.mxu0 %v1851
          %1896 = vmatprep.subr.bf16.mxu0 0
          %1897 = vmatpush1.bf16.msra.mxu0 %v1852
          %1898 = vmatprep.subr.bf16.mxu0 0
          %1899 = vmatpush1.bf16.msra.mxu0 %v1853
          %1900 = vmatprep.subr.bf16.mxu0 0
          %1901 = vmatpush1.bf16.msra.mxu0 %v1854
          %1902 = vmatprep.subr.bf16.mxu0 0
          %1903 = vmatpush1.bf16.msra.mxu0 %v1855
          %1904 = vmatprep.mubr.bf16.mxu0 %v1743
          %1905 = vmatmul.mubr.bf16.gmra.mrb[0].mxu0 %v1742
          %v1906 = vpop.f32.mrb[0].mxu0
          %v1907 = vadd.f32 0.0, %v1906
          %v1908 = vpop.f32.mrb[0].mxu0
          %v1909 = vpop.f32.mrb[0].mxu0
          %v1910 = vpop.f32.mrb[0].mxu0
          %1911 = vdwg.mxu0
          %v1912 = vtanh.pop %v1907
          %1913 = vst [vmem:[#allocation3] sm:$0xff] %v1912
          %vm1914 = vcmask 7168
          %1915 = vst.msk [vmem:[#allocation5] sm:$0xff] %vm1914, -inf
          %1916 = vst.msk [vmem:[#allocation6] sm:$0xff] %vm1914, 0.0
        $region88: #{tpu_custom_call.1} parent=55 // pred_fallthru
          _
        %v1917 = vld [vmem:[#allocation3] sm:$0xff]
        %v1918 = vpack.c.bf16 %v1917, %v1917
        %v1919 = vld [vmem:[%s445] sm:$0xf]
        %v1920 = vld [vmem:[%s445 + $0x4] sm:$0xf]
        %v1921 = vld [vmem:[%s445 + $0x8] sm:$0xf]
        %v1922 = vld [vmem:[%s445 + $0xc] sm:$0xf]
        %v1923 = vld [vmem:[%s445 + $0x10] sm:$0xf]
        %v1924 = vld [vmem:[%s445 + $0x14] sm:$0xf]
        %v1925 = vld [vmem:[%s445 + $0x18] sm:$0xf]
        %v1926 = vld [vmem:[%s445 + $0x1c] sm:$0xf]
        %v1927 = vld [vmem:[%s445 + $0x20] sm:$0xf]
        %v1928 = vld [vmem:[%s445 + $0x24] sm:$0xf]
        %v1929 = vld [vmem:[%s445 + $0x28] sm:$0xf]
        %v1930 = vld [vmem:[%s445 + $0x2c] sm:$0xf]
        %v1931 = vld [vmem:[%s445 + $0x30] sm:$0xf]
        %v1932 = vld [vmem:[%s445 + $0x34] sm:$0xf]
        %v1933 = vld [vmem:[%s445 + $0x38] sm:$0xf]
        %v1934 = vld [vmem:[%s445 + $0x3c] sm:$0xf]
        %v1935 = vld [vmem:[%s484] sm:$0x1]
        %v1937 = vlaneseq
        %v1938 = vshrl.u32 %v1937, 7
        %v1939 = vsub.s32 0, %v1938
        %v1940 = vrot.slane %v1935, %v1939
        %v1958 = vunpack.c.l.b16 %v1919
        %v1959 = vunpack.c.l.b16 %v1920
        %v1960 = vunpack.c.l.b16 %v1921
        %v1961 = vunpack.c.l.b16 %v1922
        %v1962 = vunpack.c.l.b16 %v1923
        %v1963 = vunpack.c.l.b16 %v1924
        %v1964 = vunpack.c.l.b16 %v1925
        %v1965 = vunpack.c.l.b16 %v1926
        %v1966 = vunpack.c.l.b16 %v1927
        %v1967 = vunpack.c.l.b16 %v1928
        %v1968 = vunpack.c.l.b16 %v1929
        %v1969 = vunpack.c.l.b16 %v1930
        %v1970 = vunpack.c.l.b16 %v1931
        %v1971 = vunpack.c.l.b16 %v1932
        %v1972 = vunpack.c.l.b16 %v1933
        %v1973 = vunpack.c.l.b16 %v1934
        %v1974 = vpack.c.b16 %v1959, %v1958
        %v1975 = vpack.c.b16 %v1961, %v1960
        %v1976 = vpack.c.b16 %v1963, %v1962
        %v1977 = vpack.c.b16 %v1965, %v1964
        %v1978 = vpack.c.b16 %v1967, %v1966
        %v1979 = vpack.c.b16 %v1969, %v1968
        %v1980 = vpack.c.b16 %v1971, %v1970
        %v1981 = vpack.c.b16 %v1973, %v1972
        %1990 = vmatprep.subr.bf16.mxu0 0
        %1991 = vmatpush1.bf16.msra.mxu0 %v1974
        %1992 = vmatprep.subr.bf16.mxu0 0
        %1993 = vmatpush1.bf16.msra.mxu0 %v1975
        %1994 = vmatprep.subr.bf16.mxu0 0
        %1995 = vmatpush1.bf16.msra.mxu0 %v1976
        %1996 = vmatprep.subr.bf16.mxu0 0
        %1997 = vmatpush1.bf16.msra.mxu0 %v1977
        %1998 = vmatprep.subr.bf16.mxu0 0
        %1999 = vmatpush1.bf16.msra.mxu0 %v1978
        %2000 = vmatprep.subr.bf16.mxu0 0
        %2001 = vmatpush1.bf16.msra.mxu0 %v1979
        %2002 = vmatprep.subr.bf16.mxu0 0
        %2003 = vmatpush1.bf16.msra.mxu0 %v1980
        %2004 = vmatprep.subr.bf16.mxu0 0
        %2005 = vmatpush1.bf16.msra.mxu0 %v1981
        %2006 = vmatprep.subr.bf16.mxu0 0
        %2007 = vmatpush1.bf16.msra.mxu0 0
        %2008 = vmatprep.subr.bf16.mxu0 0
        %2009 = vmatpush1.bf16.msra.mxu0 0
        %2010 = vmatprep.subr.bf16.mxu0 0
        %2011 = vmatpush1.bf16.msra.mxu0 0
        %2012 = vmatprep.subr.bf16.mxu0 0
        %2013 = vmatpush1.bf16.msra.mxu0 0
        %2014 = vmatprep.subr.bf16.mxu0 0
        %2015 = vmatpush1.bf16.msra.mxu0 0
        %2016 = vmatprep.subr.bf16.mxu0 0
        %2017 = vmatpush1.bf16.msra.mxu0 0
        %2018 = vmatprep.subr.bf16.mxu0 0
        %2019 = vmatpush1.bf16.msra.mxu0 0
        %2020 = vmatprep.subr.bf16.mxu0 0
        %2021 = vmatpush1.bf16.msra.mxu0 0
        %2022 = vmatprep.mubr.bf16.mxu0 0
        %2023 = vmatmul.mubr.bf16.gmra.mrb[0].mxu0 %v1918
        %v2024 = vpop.f32.mrb[0].mxu0
        %v2025 = vadd.f32 %v1940, %v2024
        %v2026 = vpop.f32.mrb[0].mxu0
        %v2027 = vpop.f32.mrb[0].mxu0
        %v2028 = vpop.f32.mrb[0].mxu0
        %2029 = vdwg.mxu0
        %s2030 = smul.u32 %s29, 8
        %s2031 = scalar_lea.vmem [#allocation4], %s2030
        %2032 = vst [vmem:[%s2031] sm:$0xff] %v2025
        %v2033 = vld [vmem:[#allocation5] sm:$0xff]
        %2034 = vmax.xlane.f32.xlu0 %v2025
        %v2035 = vpop.xlane.xlu0 %2034
        %v2036 = vmax.f32 %v2033, %v2035
        %v2037 = vld [vmem:[#allocation6] sm:$0xff]
        %v2038 = vsub.f32 %v2033, %v2036
        %v2039 = vmul.f32 %v2038, 1.442695
        %v2040 = vpow.pop %v2039
        %v2041 = vmul.f32 %v2037, %v2040
        %2043 = vset.pattern.permute.xlu0 0
        %2044 = vperm.xlu0 %2043, %v2036
        %v2045 = vpop.permute.xlu0 %2044
        %v2047 = vsub.f32 %v2025, %v2045
        %v2048 = vmul.f32 %v2047, 1.442695
        %v2049 = vpow.pop %v2048
        %2050 = vadd.xlane.f32.xlu0 %v2049
        %v2051 = vpop.xlane.xlu0 %2050
        %v2052 = vadd.f32 %v2041, %v2051
        %vm2053 = vcmask 7168
        %2054 = vst.msk [vmem:[#allocation6] sm:$0xff] %vm2053, %v2052
        %2055 = vst.msk [vmem:[#allocation5] sm:$0xff] %vm2053, %v2036
        %p2056 = scmp.eq.s32.totalorder %s29, 2
        // Predicated region
        $region89: #{tpu_custom_call.1} parent=55 // pred_check
          %p2057 = pneg %p2056
        $region90: #{tpu_custom_call.1} parent=55 // pred_check_branch
          %2059 = sbr.rel (%p2057) target = $region92
        $region91: #{tpu_custom_call.1} parent=55 // pred_region
          %v2060 = vld [vmem:[#allocation6] sm:$0xff]
          %v2061 = vrcp.pop %v2060
          %v2062 = vmul.f32 %v2060, %v2061
          %v2063 = vsub.f32 2.0, %v2062
          %v2064 = vmul.f32 %v2061, %v2063
          %v2065 = vld [vmem:[#allocation5] sm:$0xff]
          %v2066 = vld [vmem:[#allocation4] sm:$0xff]
          %2068 = vset.pattern.permute.xlu0 0
          %2069 = vperm.xlu0 %2068, %v2065
          %v2070 = vpop.permute.xlu0 %2069
          %v2072 = vsub.f32 %v2066, %v2070
          %v2073 = vmul.f32 %v2072, 1.442695
          %v2074 = vpow.pop %v2073
          %2076 = vset.pattern.permute.xlu0 0
          %2077 = vperm.xlu0 %2076, %v2064
          %v2078 = vpop.permute.xlu0 %2077
          %v2080 = vmul.f32 %v2074, %v2078
          %2081 = vst [vmem:[#allocation19] sm:$0xff] %v2080
          %s2082 = scalar_lea.vmem [#allocation4], 8
          %v2083 = vld [vmem:[%s2082] sm:$0xff]
          %v2084 = vsub.f32 %v2083, %v2070
          %v2085 = vmul.f32 %v2084, 1.442695
          %v2086 = vpow.pop %v2085
          %v2087 = vmul.f32 %v2086, %v2078
          %2088 = vst [vmem:[#allocation19 + $0x8] sm:$0xff] %v2087
          %s2089 = scalar_lea.vmem [#allocation4], 16
          %v2090 = vld [vmem:[%s2089] sm:$0xff]
          %v2091 = vsub.f32 %v2090, %v2070
          %v2092 = vmul.f32 %v2091, 1.442695
          %v2093 = vpow.pop %v2092
          %v2094 = vmul.f32 %v2093, %v2078
          %2095 = vst [vmem:[#allocation19 + $0x10] sm:$0xff] %v2094
        $region92: #{tpu_custom_call.1} parent=55 // pred_fallthru
          _
        // Predicated region
        $region93: #{tpu_custom_call.1} parent=55 // pred_check
          %p2096 = pneg %p241
        $region94: #{tpu_custom_call.1} parent=55 // pred_check_branch
          %2098 = sbr.rel (%p2096) target = $region96
        $region95: #{tpu_custom_call.1} parent=55 // pred_region
          %s2100 = ssub.s32 384, 384
          %2101 = vsyncadd [#allocation9], %s2100
          %s2103 = sshll.u32 [#allocation19], 4
          %s2104 = int_to_ptr.vmem [resolvable:$true] %s2103
          %2106 = dma.vmem_to_hbm [thread:$0]  %s2104, 384, %s9, [#allocation9]
        $region96: #{tpu_custom_call.1} parent=55 // pred_fallthru
          _
        // Predicated region
        $region97: #{tpu_custom_call.1} parent=55 // pred_check
          %p2107 = pneg %p262
        $region98: #{tpu_custom_call.1} parent=55 // pred_check_branch
          %2109 = sbr.rel (%p2107) target = $region100
        $region99: #{tpu_custom_call.1} parent=55 // pred_region
          %s2111 = ssub.s32 256, 256
          %2112 = vsyncadd [#allocation21], %s2111
          %s2113 = sshll.u32 [#allocation20], 4
          %s2114 = int_to_ptr.vmem [resolvable:$true] %s2113
          %2119 = dma.vmem_to_hbm [thread:$0]  %s2114, 256, %s10, [#allocation21], 128, 128, 8
        $region100: #{tpu_custom_call.1} parent=55 // pred_fallthru
          _
        // Predicated region
        $region101: #{tpu_custom_call.1} parent=55 // pred_check
          %p2120 = pneg %p283
        $region102: #{tpu_custom_call.1} parent=55 // pred_check_branch
          %2122 = sbr.rel (%p2120) target = $region104
        $region103: #{tpu_custom_call.1} parent=55 // pred_region
          %s2124 = ssub.s32 256, 256
          %2125 = vsyncadd [#allocation21], %s2124
          %s2126 = sshll.u32 [#allocation22], 4
          %s2127 = int_to_ptr.vmem [resolvable:$true] %s2126
          %2132 = dma.vmem_to_hbm [thread:$0]  %s2127, 256, %s11, [#allocation21], 128, 128, 8
        $region104: #{tpu_custom_call.1} parent=55 // pred_fallthru
          _
        // Predicated region
        $region105: #{tpu_custom_call.1} parent=55 // pred_check
          %p2133 = pneg %p241
        $region106: #{tpu_custom_call.1} parent=55 // pred_check_branch
          %2135 = sbr.rel (%p2133) target = $region108
        $region107: #{tpu_custom_call.1} parent=55 // pred_region
          %2136 = dma.done [#allocation9], 384
        $region108: #{tpu_custom_call.1} parent=55 // pred_fallthru
          _
        // Predicated region
        $region109: #{tpu_custom_call.1} parent=55 // pred_check
          %p2137 = pneg %p262
        $region110: #{tpu_custom_call.1} parent=55 // pred_check_branch
          %2139 = sbr.rel (%p2137) target = $region112
        $region111: #{tpu_custom_call.1} parent=55 // pred_region
          %2140 = dma.done [#allocation21], 256
        $region112: #{tpu_custom_call.1} parent=55 // pred_fallthru
          _
        // Predicated region
        $region113: #{tpu_custom_call.1} parent=55 // pred_check
          %p2141 = pneg %p283
        $region114: #{tpu_custom_call.1} parent=55 // pred_check_branch
          %2143 = sbr.rel (%p2141) target = $region116
        $region115: #{tpu_custom_call.1} parent=55 // pred_region
          %2144 = dma.done [#allocation21], 256
        $region116: #{tpu_custom_call.1} parent=55 // pred_fallthru
          _
      $region56: #{tpu_custom_call.1} parent=5 // pred_fallthru
        _
      %p2145 = scmp.le.s32.totalorder 2, %s24
      // Predicated region
      $region117: #{tpu_custom_call.1} parent=5 // pred_check
        %p2146 = pneg %p2145
      $region118: #{tpu_custom_call.1} parent=5 // pred_check_branch
        %2148 = sbr.rel (%p2146) target = $region120
      $region119: #{tpu_custom_call.1} parent=5 // pred_region
        %s2149 = ssub.s32 %s24, 2
      $region120: #{tpu_custom_call.1} parent=5 // pred_fallthru
        _
    $region6: #{tpu_custom_call.1} parent=1 // loop_footer
      %s28 = sadd.s32 1, %s24
    $region7: #{tpu_custom_call.1} parent=1 // loop_footer_branch
      %23 = sbr.rel target = $region3
    $region8: #{tpu_custom_call.1} parent=1 // loop_exit
      _
    %2150 = vsyncpa [#allocation8], 1
    %s2151 = scalar_lea.sflag [#allocation8], 1
    %2152 = vsyncpa %s2151, 1
    %2153 = vsyncpa [#allocation11], 1
    %2154 = vsyncpa [#allocation14], 1
    %2155 = vsyncpa [#allocation17], 1
    %2156 = vsyncpa [#allocation9], 1
    %s2157 = scalar_lea.sflag [#allocation9], 1
    %2158 = vsyncpa %s2157, 1
    %2159 = vsyncpa [#allocation21], 1

</llo_original>
